<compile_context>
chip_gen: v5e
topology: v5e:2x2
jax: 0.10.0
libtpu: 0.0.40
codegen_flags: <defaults>
</compile_context>

<pallas_src>
import functools

import jax
import jax.numpy as jnp
from jax.experimental import pallas as pl
from jax.experimental.pallas import tpu as pltpu


# ---------------------------------------------------------------------------
# DDPM schedules (pure JAX glue, mirrors torch ddpm_schedules)
# ---------------------------------------------------------------------------
def ddpm_schedules(beta1, beta2, T):
    assert beta1 < beta2 < 1.0, "beta1 and beta2 must be in (0, 1)"
    beta_t = (beta2 - beta1) * jnp.arange(0, T + 1, dtype=jnp.float32) / T + beta1
    sqrt_beta_t = jnp.sqrt(beta_t)
    alpha_t = 1.0 - beta_t
    log_alpha_t = jnp.log(alpha_t)
    alphabar_t = jnp.exp(jnp.cumsum(log_alpha_t, axis=0))
    sqrtab = jnp.sqrt(alphabar_t)
    oneover_sqrta = 1.0 / jnp.sqrt(alpha_t)
    sqrtmab = jnp.sqrt(1.0 - alphabar_t)
    mab_over_sqrtmab_inv = (1.0 - alpha_t) / sqrtmab
    return {
        "alpha_t": alpha_t,
        "oneover_sqrta": oneover_sqrta,
        "sqrt_beta_t": sqrt_beta_t,
        "alphabar_t": alphabar_t,
        "sqrtab": sqrtab,
        "sqrtmab": sqrtmab,
        "mab_over_sqrtmab": mab_over_sqrtmab_inv,
    }


# ---------------------------------------------------------------------------
# Pallas kernel (one batch tile per grid step):
#   x_t  = sqrtab[t]*x + sqrtmab[t]*noise                       (f32, VPU)
#   eps  = relu([x_t, c, t/n_T] @ W1 + b1) @ W2 + b2            (bf16 MXU, f32 acc)
#   out  += per-sublane-group partial sums of (noise - eps)^2   (f32, VPU)
# ---------------------------------------------------------------------------
def ddpm_loss_kernel(x_ref, noise_ref, ct_ref, coef_ref,
                     w1_ref, b1_ref, w2_ref, b2_ref,
                     out_ref, xt_ref, *, d):
    t = pl.program_id(1)

    @pl.when(t == 0)
    def _init():
        # The (8, d) output block is VMEM-resident across the whole
        # "arbitrary" tile axis of this group -> it is the accumulator.
        out_ref[...] = jnp.zeros_like(out_ref)

    x = x_ref[...].astype(jnp.float32)          # (TB, d) f32
    noise = noise_ref[...].astype(jnp.float32)  # (TB, d) f32
    coef = coef_ref[...]                        # (TB, 2) f32: [sqrtab, sqrtmab]

    # Forward diffusion step (elementwise, f32 on all chips incl. v5e).
    x_t = coef[:, 0:1] * x + coef[:, 1:2] * noise

    # Stage the fused first-layer operand [x_t | c | t/n_T] (bf16) so the
    # first layer is ONE MXU push with K = d + C + 1 instead of two dots.
    xt_ref[:, 0:d] = x_t.astype(jnp.bfloat16)
    xt_ref[:, d:] = ct_ref[...]

    h = jnp.dot(xt_ref[...], w1_ref[...], preferred_element_type=jnp.float32)
    h = jnp.maximum(h + b1_ref[...], 0.0)
    eps = jnp.dot(h.astype(jnp.bfloat16), w2_ref[...],
                  preferred_element_type=jnp.float32) + b2_ref[...]

    # Squared-error partial sums reduced only down to 8 sublanes per step:
    # reshape (TB, d) -> (TB//8, 8, d) and sum over the leading dim, which is
    # pure VPU vreg adds (no cross-sublane XLU reduce on the critical path).
    diff = eps - noise
    sq = diff * diff
    tb = sq.shape[0]
    out_ref[...] += jnp.sum(sq.reshape(tb // 8, 8, d), axis=0)


def _padded_row_bytes(n_lanes, itemsize):
    return ((n_lanes + 127) // 128) * 128 * itemsize


@functools.partial(jax.jit,
                   static_argnames=("n_T", "tb", "num_groups", "stream_bf16"))
def ddpm_loss_pallas(x, noise, c_rep, ts, sqrtab, sqrtmab, params,
                     *, n_T, tb=None, num_groups=None, stream_bf16=False):
    """x, noise: (B, D) f32; c_rep: (B, C) f32; ts: (B,) int; sqrtab/sqrtmab: (n_T+1,)."""
    w1x, w1c, w1t, b1, w2, b2 = params
    B, D = x.shape
    C = c_rep.shape[1]
    H = w1x.shape[1]
    K = D + C + 1

    # --- per-sample schedule coefficients & conditioning (same jit) ---------
    coef = jnp.stack([sqrtab[ts], sqrtmab[ts]], axis=1).astype(jnp.float32)  # (B, 2)
    t_norm = (ts.astype(jnp.float32) / n_T)[:, None]                          # (B, 1)
    ct = jnp.concatenate([c_rep, t_norm], axis=1).astype(jnp.bfloat16)        # (B, C+1)

    # --- weights: packed / cast once, VMEM-resident across the grid ---------
    w1 = jnp.concatenate([w1x, w1c, w1t], axis=0).astype(jnp.bfloat16)        # (K, H)
    w2_b = w2.astype(jnp.bfloat16)                                            # (H, D)
    b1_2 = b1.reshape(1, H).astype(jnp.float32)
    b2_2 = b2.reshape(1, D).astype(jnp.float32)

    if stream_bf16:
        # Halves the dominant HBM traffic (x + noise) -- quantizes the inputs.
        x = x.astype(jnp.bfloat16)
        noise = noise.astype(jnp.bfloat16)
    in_itemsize = x.dtype.itemsize

    # --- batch tile: target >= ~2 MiB of x+noise per grid step --------------
    if tb is None:
        rows = max(16, (2 * 1024 * 1024) // (2 * D * in_itemsize))
        tb = min(B, rows - rows % 16)
        while B % tb != 0:            # shrink to a divisor of B
            tb -= 8
    assert tb >= 8 and tb % 8 == 0 and B % tb == 0, (B, tb)
    # TODO(synk): no masking path for a ragged final tile; B must divide by tb.
    num_tiles = B // tb

    # --- megacore: give v7x's two TensorCores independent batch groups ------
    if num_groups is None:
        num_groups = 2 if (num_tiles >= 2 and num_tiles % 2 == 0) else 1
    assert num_tiles % num_groups == 0, (num_tiles, num_groups)
    tiles_per_group = num_tiles // num_groups

    # --- explicit VMEM budget (lane-padded, double-buffered input streams) --
    stream_row = (2 * _padded_row_bytes(D, in_itemsize)      # x + noise
                  + _padded_row_bytes(C + 1, 2)              # ct (bf16)
                  + _padded_row_bytes(2, 4))                 # coef (f32)
    fixed = (K * _padded_row_bytes(H, 2) + H * _padded_row_bytes(D, 2)
             + _padded_row_bytes(H, 4) + _padded_row_bytes(D, 4)
             + 8 * _padded_row_bytes(D, 4)
             + tb * _padded_row_bytes(K, 2))                 # fused-operand scratch
    vmem_needed = 2 * tb * stream_row + fixed
    vmem_limit = int(min(64 * 2**20, max(32 * 2**20, 2 * vmem_needed)))

    kernel = functools.partial(ddpm_loss_kernel, d=D)

    def batch_spec(width):
        return pl.BlockSpec((tb, width), lambda g, t: (g * tiles_per_group + t, 0))

    def resident_spec(shape):
        return pl.BlockSpec(shape, lambda g, t: (0, 0))

    flops = 2 * B * (K * H + H * D)
    bytes_accessed = int((x.size + noise.size) * in_itemsize
                         + ct.size * 2 + coef.size * 4
                         + w1.size * 2 + w2_b.size * 2
                         + (b1_2.size + b2_2.size) * 4
                         + num_groups * 8 * D * 4)

    partial_sums = pl.pallas_call(
        kernel,
        out_shape=jax.ShapeDtypeStruct((num_groups * 8, D), jnp.float32),
        grid=(num_groups, tiles_per_group),
        in_specs=[
            batch_spec(D),            # x
            batch_spec(D),            # noise
            batch_spec(C + 1),        # [c, t/n_T]   (bf16)
            batch_spec(2),            # [sqrtab[t], sqrtmab[t]]
            resident_spec((K, H)),    # W1 = [W1x; W1c; W1t] (bf16)
            resident_spec((1, H)),    # b1
            resident_spec((H, D)),    # W2 (bf16)
            resident_spec((1, D)),    # b2
        ],
        out_specs=pl.BlockSpec((8, D), lambda g, t: (g, 0)),
        scratch_shapes=[pltpu.VMEM((tb, K), jnp.bfloat16)],
        compiler_params=pltpu.CompilerParams(
            # group axis -> both TensorCores on v7x; tile axis carries the
            # per-group loss accumulation -> "arbitrary".
            dimension_semantics=("parallel", "arbitrary"),
            vmem_limit_bytes=vmem_limit),
        cost_estimate=pl.CostEstimate(
            flops=int(flops), transcendentals=0, bytes_accessed=bytes_accessed),
    )(x, noise, ct, coef, w1, b1_2, w2_b, b2_2)

    # Tiny (G*8, D) cross-sublane/lane reduction + normalization in plain JAX.
    return jnp.sum(partial_sums) / (B * D)


# ---------------------------------------------------------------------------
# References (for verification)
# ---------------------------------------------------------------------------
def ddpm_loss_ref_bf16(x, noise, c_rep, ts, sqrtab, sqrtmab, params, *, n_T,
                       stream_bf16=False):
    """Mirrors the kernel's bf16-matmul / f32-accumulate numerics."""
    w1x, w1c, w1t, b1, w2, b2 = params
    if stream_bf16:
        x = x.astype(jnp.bfloat16).astype(jnp.float32)
        noise = noise.astype(jnp.bfloat16).astype(jnp.float32)
    coef_a = sqrtab[ts][:, None]
    coef_b = sqrtmab[ts][:, None]
    t_norm = (ts.astype(jnp.float32) / n_T)[:, None]
    ct = jnp.concatenate([c_rep, t_norm], axis=1).astype(jnp.bfloat16)
    w1 = jnp.concatenate([w1x, w1c, w1t], axis=0).astype(jnp.bfloat16)
    x_t = coef_a * x + coef_b * noise
    fused = jnp.concatenate([x_t.astype(jnp.bfloat16), ct], axis=1)
    h = jnp.maximum(jnp.dot(fused, w1, preferred_element_type=jnp.float32) + b1, 0.0)
    eps = jnp.dot(h.astype(jnp.bfloat16), w2.astype(jnp.bfloat16),
                  preferred_element_type=jnp.float32) + b2
    return jnp.mean((eps - noise) ** 2)


def ddpm_loss_ref_f32(x, noise, c_rep, ts, sqrtab, sqrtmab, params, *, n_T):
    """Full-f32 reference (original module semantics)."""
    w1x, w1c, w1t, b1, w2, b2 = params
    coef_a = sqrtab[ts][:, None]
    coef_b = sqrtmab[ts][:, None]
    t_norm = (ts.astype(jnp.float32) / n_T)[:, None]
    x_t = coef_a * x + coef_b * noise
    h = jnp.maximum(x_t @ w1x + c_rep @ w1c + t_norm @ w1t + b1, 0.0)
    eps = h @ w2 + b2
    return jnp.mean((eps - noise) ** 2)


# ---------------------------------------------------------------------------
# Driver
# ---------------------------------------------------------------------------
if __name__ == "__main__":
    # Small, module-consistent shapes.
    n_sets = 2            # number of contexts
    num_samples = 256     # x.shape[0] // c.shape[0]
    B = n_sets * num_samples   # 512
    D = 32                # noise_shape = (D,)
    C = 8                 # context feature dim
    H = 64                # MLP hidden width
    n_T = 100
    betas = (1e-4, 0.02)

    key = jax.random.PRNGKey(0)
    kx, kc, kt, kn, kw1, kw2, kb1, kb2 = jax.random.split(key, 8)

    # Data.
    x = jax.random.normal(kx, (B, D), dtype=jnp.float32)
    c = jax.random.normal(kc, (n_sets, C), dtype=jnp.float32)

    # c.unsqueeze(1).repeat(1, B // n_sets, 1).view(-1, C)  -> repeat rows.
    c_rep = jnp.repeat(c, num_samples, axis=0)               # (B, C)

    # _ts ~ randint(1, n_T + 1), noise ~ N(0, 1).
    _ts = jax.random.randint(kt, (B,), 1, n_T + 1)
    noise = jax.random.normal(kn, (B, D), dtype=jnp.float32)

    sched = ddpm_schedules(betas[0], betas[1], n_T)
    sqrtab, sqrtmab = sched["sqrtab"], sched["sqrtmab"]

    # Deterministic synthetic model weights (the nn.Module's `model`).
    w1x = 0.05 * jax.random.normal(kw1, (D, H), dtype=jnp.float32)
    w1c = 0.05 * jax.random.normal(kw2, (C, H), dtype=jnp.float32)
    w1t = 0.05 * jax.random.normal(kb1, (1, H), dtype=jnp.float32)
    b1 = jnp.zeros((1, H), dtype=jnp.float32)
    w2 = 0.05 * jax.random.normal(kb2, (H, D), dtype=jnp.float32)
    b2 = jnp.zeros((1, D), dtype=jnp.float32)
    params = (w1x, w1c, w1t, b1, w2, b2)

    # 1) Default config: adaptive tile -> the whole B=512 batch in ONE grid step.
    loss = ddpm_loss_pallas(x, noise, c_rep, _ts, sqrtab, sqrtmab, params, n_T=n_T)
    loss = jax.block_until_ready(loss)

    ref_bf16 = ddpm_loss_ref_bf16(x, noise, c_rep, _ts, sqrtab, sqrtmab, params, n_T=n_T)
    assert jnp.allclose(loss, ref_bf16, rtol=2e-3, atol=1e-5), (loss, ref_bf16)

    ref_f32 = ddpm_loss_ref_f32(x, noise, c_rep, _ts, sqrtab, sqrtmab, params, n_T=n_T)
    assert jnp.allclose(loss, ref_f32, rtol=2e-2, atol=2e-3), (loss, ref_f32)

    # 2) Multi-tile, two-group config (exercises the megacore "parallel" axis
    #    and the per-group accumulator across the "arbitrary" tile axis).
    loss_mg = ddpm_loss_pallas(x, noise, c_rep, _ts, sqrtab, sqrtmab, params,
                               n_T=n_T, tb=128, num_groups=2)
    loss_mg = jax.block_until_ready(loss_mg)
    assert jnp.allclose(loss_mg, loss, rtol=1e-4, atol=1e-6), (loss_mg, loss)

    # 3) Optional bf16 input streaming (halves the dominant HBM traffic).
    loss_b16 = ddpm_loss_pallas(x, noise, c_rep, _ts, sqrtab, sqrtmab, params,
                                n_T=n_T, stream_bf16=True)
    loss_b16 = jax.block_until_ready(loss_b16)
    ref_b16s = ddpm_loss_ref_bf16(x, noise, c_rep, _ts, sqrtab, sqrtmab, params,
                                  n_T=n_T, stream_bf16=True)
    assert jnp.allclose(loss_b16, ref_b16s, rtol=2e-3, atol=1e-5), (loss_b16, ref_b16s)
    assert jnp.allclose(loss_b16, ref_f32, rtol=5e-2, atol=5e-3), (loss_b16, ref_f32)

    # TODO(synk): DDPM.sample() is an n_T-step sequential loop around an
    # arbitrary model with host-side prints, and the subsample_indices branch
    # needs random permutations/gather; only forward()/loss() is kernelized.
    print("KERNEL_OK")
</pallas_src>

<mosaic_0001>
module attributes {stable_mosaic.version = 11 : i64} {
  func.func @ddpm_loss_kernel(%arg0: i32, %arg1: i32, %arg2: memref<512x32xf32, #tpu.memory_space<vmem>>, %arg3: memref<512x32xf32, #tpu.memory_space<vmem>>, %arg4: memref<512x9xbf16, #tpu.memory_space<vmem>>, %arg5: memref<512x2xf32, #tpu.memory_space<vmem>>, %arg6: memref<41x64xbf16, #tpu.memory_space<vmem>>, %arg7: memref<1x64xf32, #tpu.memory_space<vmem>>, %arg8: memref<64x32xbf16, #tpu.memory_space<vmem>>, %arg9: memref<1x32xf32, #tpu.memory_space<vmem>>, %arg10: memref<8x32xf32, #tpu.memory_space<vmem>>, %arg11: memref<512x41xbf16, #tpu.memory_space<vmem>>) attributes {dimension_semantics = [#tpu.dimension_semantics<parallel>, #tpu.dimension_semantics<arbitrary>], iteration_bounds = array<i64: 1, 1>, scalar_prefetch = 0 : i64, scratch_operands = 1 : i64, tpu.core_type = #tpu.core_type<tc>, window_params = [{transform_indices = @transform_0, window_bounds = array<i64: 512, 32>}, {transform_indices = @transform_1, window_bounds = array<i64: 512, 32>}, {transform_indices = @transform_2, window_bounds = array<i64: 512, 9>}, {transform_indices = @transform_3, window_bounds = array<i64: 512, 2>}, {pipeline_mode = #tpu.pipeline_mode<synchronous>, transform_indices = @transform_4, window_bounds = array<i64: 41, 64>}, {pipeline_mode = #tpu.pipeline_mode<synchronous>, transform_indices = @transform_5, window_bounds = array<i64: 1, 64>}, {pipeline_mode = #tpu.pipeline_mode<synchronous>, transform_indices = @transform_6, window_bounds = array<i64: 64, 32>}, {pipeline_mode = #tpu.pipeline_mode<synchronous>, transform_indices = @transform_7, window_bounds = array<i64: 1, 32>}, {transform_indices = @transform_8, window_bounds = array<i64: 8, 32>}]} {
    %c0_i32 = arith.constant 0 : i32
    %0 = arith.cmpi eq, %arg1, %c0_i32 : i32
    %1 = arith.extui %0 : i1 to i32
    %c0_i32_0 = arith.constant 0 : i32
    %2 = arith.cmpi ne, %1, %c0_i32_0 : i32
    scf.if %2 {
      %cst_28 = arith.constant 0.000000e+00 : f32
      %38 = vector.broadcast %cst_28 : f32 to vector<8x32xf32>
      %c0_29 = arith.constant 0 : index
      %c0_30 = arith.constant 0 : index
      %39 = vector.load %arg10[%c0_29, %c0_30] : memref<8x32xf32, #tpu.memory_space<vmem>>, vector<8x32xf32>
      tpu.vector_store %arg10[%c0_29, %c0_30], %38 {strides = array<i32>} : memref<8x32xf32, #tpu.memory_space<vmem>>, vector<8x32xf32>,
    } else {
    }
    %c0 = arith.constant 0 : index
    %c0_1 = arith.constant 0 : index
    %3 = vector.load %arg2[%c0, %c0_1] : memref<512x32xf32, #tpu.memory_space<vmem>>, vector<512x32xf32>
    %c0_2 = arith.constant 0 : index
    %c0_3 = arith.constant 0 : index
    %4 = vector.load %arg3[%c0_2, %c0_3] : memref<512x32xf32, #tpu.memory_space<vmem>>, vector<512x32xf32>
    %c0_4 = arith.constant 0 : index
    %c0_5 = arith.constant 0 : index
    %5 = vector.load %arg5[%c0_4, %c0_5] : memref<512x2xf32, #tpu.memory_space<vmem>>, vector<512x2xf32>
    %6 = vector.extract_strided_slice %5 {offsets = [0, 0], sizes = [512, 1], strides = [1, 1]} : vector<512x2xf32> to vector<512x1xf32>
    %7 = vector.broadcast %6 : vector<512x1xf32> to vector<512x32xf32>
    %8 = arith.mulf %7, %3 : vector<512x32xf32>
    %9 = vector.extract_strided_slice %5 {offsets = [0, 1], sizes = [512, 1], strides = [1, 1]} : vector<512x2xf32> to vector<512x1xf32>
    %10 = vector.broadcast %9 : vector<512x1xf32> to vector<512x32xf32>
    %11 = arith.mulf %10, %4 : vector<512x32xf32>
    %12 = arith.addf %8, %11 : vector<512x32xf32>
    %13 = arith.truncf %12 : vector<512x32xf32> to vector<512x32xbf16>
    %c0_6 = arith.constant 0 : index
    %c0_7 = arith.constant 0 : index
    %14 = vector.load %arg11[%c0_6, %c0_7] : memref<512x41xbf16, #tpu.memory_space<vmem>>, vector<512x32xbf16>
    tpu.vector_store %arg11[%c0_6, %c0_7], %13 {strides = array<i32>} : memref<512x41xbf16, #tpu.memory_space<vmem>>, vector<512x32xbf16>,
    %c0_8 = arith.constant 0 : index
    %c0_9 = arith.constant 0 : index
    %15 = vector.load %arg4[%c0_8, %c0_9] : memref<512x9xbf16, #tpu.memory_space<vmem>>, vector<512x9xbf16>
    %c0_10 = arith.constant 0 : index
    %c32 = arith.constant 32 : index
    %16 = vector.load %arg11[%c0_10, %c32] : memref<512x41xbf16, #tpu.memory_space<vmem>>, vector<512x9xbf16>
    tpu.vector_store %arg11[%c0_10, %c32], %15 {strides = array<i32>} : memref<512x41xbf16, #tpu.memory_space<vmem>>, vector<512x9xbf16>,
    %c0_11 = arith.constant 0 : index
    %c0_12 = arith.constant 0 : index
    %17 = vector.load %arg11[%c0_11, %c0_12] : memref<512x41xbf16, #tpu.memory_space<vmem>>, vector<512x41xbf16>
    %c0_13 = arith.constant 0 : index
    %c0_14 = arith.constant 0 : index
    %18 = vector.load %arg6[%c0_13, %c0_14] : memref<41x64xbf16, #tpu.memory_space<vmem>>, vector<41x64xbf16>
    %cst = arith.constant dense<0.000000e+00> : vector<512x64xf32>
    %19 = tpu.matmul %17, %18, %cst {dimension_numbers = #tpu.dot_dimension_numbers<[1], [0], [0], [1], [0, 0, 1, 1], [], []>} : vector<512x41xbf16>, vector<41x64xbf16>, vector<512x64xf32> -> vector<512x64xf32>
    %c0_15 = arith.constant 0 : index
    %c0_16 = arith.constant 0 : index
    %20 = vector.load %arg7[%c0_15, %c0_16] : memref<1x64xf32, #tpu.memory_space<vmem>>, vector<1x64xf32>
    %21 = vector.broadcast %20 : vector<1x64xf32> to vector<512x64xf32>
    %22 = arith.addf %19, %21 : vector<512x64xf32>
    %cst_17 = arith.constant 0.000000e+00 : f32
    %23 = vector.broadcast %cst_17 : f32 to vector<512x64xf32>
    %24 = arith.maximumf %22, %23 : vector<512x64xf32>
    %25 = arith.truncf %24 : vector<512x64xf32> to vector<512x64xbf16>
    %c0_18 = arith.constant 0 : index
    %c0_19 = arith.constant 0 : index
    %26 = vector.load %arg8[%c0_18, %c0_19] : memref<64x32xbf16, #tpu.memory_space<vmem>>, vector<64x32xbf16>
    %cst_20 = arith.constant dense<0.000000e+00> : vector<512x32xf32>
    %27 = tpu.matmul %25, %26, %cst_20 {dimension_numbers = #tpu.dot_dimension_numbers<[1], [0], [0], [1], [0, 0, 1, 1], [], []>} : vector<512x64xbf16>, vector<64x32xbf16>, vector<512x32xf32> -> vector<512x32xf32>
    %c0_21 = arith.constant 0 : index
    %c0_22 = arith.constant 0 : index
    %28 = vector.load %arg9[%c0_21, %c0_22] : memref<1x32xf32, #tpu.memory_space<vmem>>, vector<1x32xf32>
    %29 = vector.broadcast %28 : vector<1x32xf32> to vector<512x32xf32>
    %30 = arith.addf %27, %29 : vector<512x32xf32>
    %31 = arith.subf %30, %4 : vector<512x32xf32>
    %32 = arith.mulf %31, %31 : vector<512x32xf32>
    %c0_23 = arith.constant 0 : index
    %c0_24 = arith.constant 0 : index
    %33 = vector.load %arg10[%c0_23, %c0_24] : memref<8x32xf32, #tpu.memory_space<vmem>>, vector<8x32xf32>
    %34 = vector.shape_cast %32 : vector<512x32xf32> to vector<64x8x32xf32>
    %cst_25 = arith.constant dense<0.000000e+00> : vector<8x32xf32>
    %35 = vector.multi_reduction <add>, %34, %cst_25 [0] : vector<64x8x32xf32> to vector<8x32xf32>
    %36 = arith.addf %33, %35 : vector<8x32xf32>
    %c0_26 = arith.constant 0 : index
    %c0_27 = arith.constant 0 : index
    %37 = vector.load %arg10[%c0_26, %c0_27] : memref<8x32xf32, #tpu.memory_space<vmem>>, vector<8x32xf32>
    tpu.vector_store %arg10[%c0_26, %c0_27], %36 {strides = array<i32>} : memref<8x32xf32, #tpu.memory_space<vmem>>, vector<8x32xf32>,
    return
  }
  func.func @transform_0(%arg0: i32, %arg1: i32) -> (i32, i32) {
    %c1_i32 = arith.constant 1 : i32
    %0 = arith.muli %arg0, %c1_i32 : i32
    %1 = arith.addi %0, %arg1 : i32
    %c0_i32 = arith.constant 0 : i32
    %c0_i32_0 = arith.constant 0 : i32
    return %1, %c0_i32 : i32, i32
  }
  func.func @transform_1(%arg0: i32, %arg1: i32) -> (i32, i32) {
    %c1_i32 = arith.constant 1 : i32
    %0 = arith.muli %arg0, %c1_i32 : i32
    %1 = arith.addi %0, %arg1 : i32
    %c0_i32 = arith.constant 0 : i32
    %c0_i32_0 = arith.constant 0 : i32
    return %1, %c0_i32 : i32, i32
  }
  func.func @transform_2(%arg0: i32, %arg1: i32) -> (i32, i32) {
    %c1_i32 = arith.constant 1 : i32
    %0 = arith.muli %arg0, %c1_i32 : i32
    %1 = arith.addi %0, %arg1 : i32
    %c0_i32 = arith.constant 0 : i32
    %c0_i32_0 = arith.constant 0 : i32
    return %1, %c0_i32 : i32, i32
  }
  func.func @transform_3(%arg0: i32, %arg1: i32) -> (i32, i32) {
    %c1_i32 = arith.constant 1 : i32
    %0 = arith.muli %arg0, %c1_i32 : i32
    %1 = arith.addi %0, %arg1 : i32
    %c0_i32 = arith.constant 0 : i32
    %c0_i32_0 = arith.constant 0 : i32
    return %1, %c0_i32 : i32, i32
  }
  func.func @transform_4(%arg0: i32, %arg1: i32) -> (i32, i32) {
    %c0_i32 = arith.constant 0 : i32
    %c0_i32_0 = arith.constant 0 : i32
    %c0_i32_1 = arith.constant 0 : i32
    return %c0_i32, %c0_i32_0 : i32, i32
  }
  func.func @transform_5(%arg0: i32, %arg1: i32) -> (i32, i32) {
    %c0_i32 = arith.constant 0 : i32
    %c0_i32_0 = arith.constant 0 : i32
    %c0_i32_1 = arith.constant 0 : i32
    return %c0_i32, %c0_i32_0 : i32, i32
  }
  func.func @transform_6(%arg0: i32, %arg1: i32) -> (i32, i32) {
    %c0_i32 = arith.constant 0 : i32
    %c0_i32_0 = arith.constant 0 : i32
    %c0_i32_1 = arith.constant 0 : i32
    return %c0_i32, %c0_i32_0 : i32, i32
  }
  func.func @transform_7(%arg0: i32, %arg1: i32) -> (i32, i32) {
    %c0_i32 = arith.constant 0 : i32
    %c0_i32_0 = arith.constant 0 : i32
    %c0_i32_1 = arith.constant 0 : i32
    return %c0_i32, %c0_i32_0 : i32, i32
  }
  func.func @transform_8(%arg0: i32, %arg1: i32) -> (i32, i32) {
    %c0_i32 = arith.constant 0 : i32
    %c0_i32_0 = arith.constant 0 : i32
    return %arg0, %c0_i32 : i32, i32
  }
}

</mosaic_0001>

<llo_original>
// kernel: ddpm_loss_pallas.1
$region0: #{ddpm_loss_pallas.1}
  #allocation0 [shape = 'u32[]', space=smem, size = 0x4, offset = 0x4, fixed_abs, tag = 'smem constant byte address 0x4 - core index']
  #allocation1 [shape = 'u32[72,128]{1,0:T(1,128)}', space=vmem, size = 0x9000, scoped, tag = 'internal scratch']
  #allocation2 [shape = 'bf16[512,41]{1,0:T(8,128)(2,1)}', space=vmem, size = 0x20000, scoped, tag = 'scratch operand']
  %s0 = inlined_call_operand.vmem [shape: f32[512,32], index: 0, kind: input, shape index: {}]
  %s1 = inlined_call_operand.vmem [shape: f32[512,32], index: 1, kind: input, shape index: {}]
  %s2 = inlined_call_operand.vmem [shape: bf16[512,9], index: 2, kind: input, shape index: {}]
  %s3 = inlined_call_operand.vmem [shape: f32[512,2], index: 3, kind: input, shape index: {}]
  %s4 = inlined_call_operand.vmem [shape: bf16[41,64], index: 4, kind: input, shape index: {}]
  %s5 = inlined_call_operand.vmem [shape: f32[1,64], index: 5, kind: input, shape index: {}]
  %s6 = inlined_call_operand.vmem [shape: bf16[64,32], index: 6, kind: input, shape index: {}]
  %s7 = inlined_call_operand.vmem [shape: f32[1,32], index: 7, kind: input, shape index: {}]
  %s8 = inlined_call_operand.vmem [shape: f32[8,32], index: 8, kind: output, shape index: {}]
  %s9 = sld [smem:[#allocation0]]
  $region46: #{ddpm_loss_pallas.1} parent=0
    _
  %s11 = ssub.s32 1, %s9
  %s12 = scalar_select 0, %s11, %s9
  // Predicated region
  $region2: #{ddpm_loss_pallas.1} parent=0 // pred_check
    _
  $region3: #{ddpm_loss_pallas.1} parent=0 // pred_check_branch
    %14 = sbr.rel (0) target = $region5
  $region4: #{ddpm_loss_pallas.1} parent=0 // pred_region
    %s15 = sadd.s32 0, 0
    %s16 = smul.u32 64, %s15
    %p17 = scmp.lt.s32.totalorder %s16, 63
    %s18 = scalar_select %p17, %s16, 63
    %s19 = smul.addr %s18, 8
    %s20 = scalar_lea.vmem %s0, %s19
    %s21 = sadd.s32 0, 0
    %s22 = smul.u32 64, %s21
  $region5: #{ddpm_loss_pallas.1} parent=0 // pred_fallthru
    _
  // Predicated region
  $region6: #{ddpm_loss_pallas.1} parent=0 // pred_check
    _
  $region7: #{ddpm_loss_pallas.1} parent=0 // pred_check_branch
    %24 = sbr.rel (0) target = $region9
  $region8: #{ddpm_loss_pallas.1} parent=0 // pred_region
    %s25 = sadd.s32 0, 0
    %s26 = smul.u32 64, %s25
    %p27 = scmp.lt.s32.totalorder %s26, 63
    %s28 = scalar_select %p27, %s26, 63
    %s29 = smul.addr %s28, 8
    %s30 = scalar_lea.vmem %s1, %s29
    %s31 = sadd.s32 0, 0
    %s32 = smul.u32 64, %s31
  $region9: #{ddpm_loss_pallas.1} parent=0 // pred_fallthru
    _
  // Predicated region
  $region10: #{ddpm_loss_pallas.1} parent=0 // pred_check
    _
  $region11: #{ddpm_loss_pallas.1} parent=0 // pred_check_branch
    %34 = sbr.rel (0) target = $region13
  $region12: #{ddpm_loss_pallas.1} parent=0 // pred_region
    %s35 = sadd.s32 0, 0
    %s36 = smul.u32 64, %s35
    %p37 = scmp.lt.s32.totalorder %s36, 63
    %s38 = scalar_select %p37, %s36, 63
    %s39 = smul.addr %s38, 4
    %s40 = scalar_lea.vmem %s2, %s39
    %s41 = sadd.s32 0, 0
    %s42 = smul.u32 64, %s41
  $region13: #{ddpm_loss_pallas.1} parent=0 // pred_fallthru
    _
  // Predicated region
  $region14: #{ddpm_loss_pallas.1} parent=0 // pred_check
    _
  $region15: #{ddpm_loss_pallas.1} parent=0 // pred_check_branch
    %44 = sbr.rel (0) target = $region17
  $region16: #{ddpm_loss_pallas.1} parent=0 // pred_region
    %s45 = sadd.s32 0, 0
    %s46 = smul.u32 64, %s45
    %p47 = scmp.lt.s32.totalorder %s46, 63
    %s48 = scalar_select %p47, %s46, 63
    %s49 = smul.addr %s48, 8
    %s50 = scalar_lea.vmem %s3, %s49
    %s51 = sadd.s32 0, 0
    %s52 = smul.u32 64, %s51
  $region17: #{ddpm_loss_pallas.1} parent=0 // pred_fallthru
    _
  // Predicated region
  $region18: #{ddpm_loss_pallas.1} parent=0 // pred_check
    _
  $region19: #{ddpm_loss_pallas.1} parent=0 // pred_check_branch
    %54 = sbr.rel (0) target = $region21
  $region20: #{ddpm_loss_pallas.1} parent=0 // pred_region
    _
  $region21: #{ddpm_loss_pallas.1} parent=0 // pred_fallthru
    _
  // Predicated region
  $region22: #{ddpm_loss_pallas.1} parent=0 // pred_check
    _
  $region23: #{ddpm_loss_pallas.1} parent=0 // pred_check_branch
    %56 = sbr.rel (0) target = $region25
  $region24: #{ddpm_loss_pallas.1} parent=0 // pred_region
    _
  $region25: #{ddpm_loss_pallas.1} parent=0 // pred_fallthru
    _
  // Predicated region
  $region26: #{ddpm_loss_pallas.1} parent=0 // pred_check
    _
  $region27: #{ddpm_loss_pallas.1} parent=0 // pred_check_branch
    %58 = sbr.rel (0) target = $region29
  $region28: #{ddpm_loss_pallas.1} parent=0 // pred_region
    _
  $region29: #{ddpm_loss_pallas.1} parent=0 // pred_fallthru
    _
  // Predicated region
  $region30: #{ddpm_loss_pallas.1} parent=0 // pred_check
    _
  $region31: #{ddpm_loss_pallas.1} parent=0 // pred_check_branch
    %60 = sbr.rel (0) target = $region33
  $region32: #{ddpm_loss_pallas.1} parent=0 // pred_region
    _
  $region33: #{ddpm_loss_pallas.1} parent=0 // pred_fallthru
    _
  %s61 = sadd.s32 0, 0
  %s62 = smul.u32 64, %s61
  %p63 = scmp.lt.s32.totalorder %s62, 63
  %s64 = scalar_select %p63, %s62, 63
  %s65 = smul.addr %s64, 8
  %s66 = scalar_lea.vmem %s0, %s65
  %s67 = sadd.s32 0, 0
  %s68 = smul.u32 64, %s67
  %p69 = scmp.lt.s32.totalorder %s68, 63
  %s70 = scalar_select %p69, %s68, 63
  %s71 = smul.addr %s70, 8
  %s72 = scalar_lea.vmem %s1, %s71
  %s73 = sadd.s32 0, 0
  %s74 = smul.u32 64, %s73
  %p75 = scmp.lt.s32.totalorder %s74, 63
  %s76 = scalar_select %p75, %s74, 63
  %s77 = smul.addr %s76, 4
  %s78 = scalar_lea.vmem %s2, %s77
  %s79 = sadd.s32 0, 0
  %s80 = smul.u32 64, %s79
  %p81 = scmp.lt.s32.totalorder %s80, 63
  %s82 = scalar_select %p81, %s80, 63
  %s83 = smul.addr %s82, 8
  %s84 = scalar_lea.vmem %s3, %s83
  %s85 = sadd.s32 0, 0
  %s86 = smul.u32 64, %s85
  %p87 = scmp.lt.s32.totalorder %s86, 63
  %s88 = scalar_select %p87, %s86, 63
  %s89 = smul.addr %s88, 8
  %s90 = scalar_lea.vmem %s0, %s89
  %s91 = sadd.s32 0, 0
  %s92 = smul.u32 64, %s91
  %s93 = sadd.s32 0, 0
  %s94 = smul.u32 64, %s93
  %p95 = scmp.lt.s32.totalorder %s94, 63
  %s96 = scalar_select %p95, %s94, 63
  %s97 = smul.addr %s96, 8
  %s98 = scalar_lea.vmem %s1, %s97
  %s99 = sadd.s32 0, 0
  %s100 = smul.u32 64, %s99
  %s101 = sadd.s32 0, 0
  %s102 = smul.u32 64, %s101
  %p103 = scmp.lt.s32.totalorder %s102, 63
  %s104 = scalar_select %p103, %s102, 63
  %s105 = smul.addr %s104, 4
  %s106 = scalar_lea.vmem %s2, %s105
  %s107 = sadd.s32 0, 0
  %s108 = smul.u32 64, %s107
  %s109 = sadd.s32 0, 0
  %s110 = smul.u32 64, %s109
  %p111 = scmp.lt.s32.totalorder %s110, 63
  %s112 = scalar_select %p111, %s110, 63
  %s113 = smul.addr %s112, 8
  %s114 = scalar_lea.vmem %s3, %s113
  %s115 = sadd.s32 0, 0
  %s116 = smul.u32 64, %s115
  %p118 = scmp.eq.s32.totalorder 0, 0
  // Predicated region
  $region34: #{ddpm_loss_pallas.1} parent=0 // pred_check
    %p119 = pneg %p118
  $region35: #{ddpm_loss_pallas.1} parent=0 // pred_check_branch
    %121 = sbr.rel (%p119) target = $region37
  $region36: #{ddpm_loss_pallas.1} parent=0 // pred_region
    %vm122 = vcmask 261120
    %123 = vst.msk [vmem:[%s8] sm:$0xff] %vm122, 0.0
  $region37: #{ddpm_loss_pallas.1} parent=0 // pred_fallthru
    _
  %v124 = vld [vmem:[%s90] sm:$0xff]
  %v125 = vld [vmem:[%s90 + $0x8] sm:$0xff]
  %v126 = vld [vmem:[%s90 + $0x10] sm:$0xff]
  %v127 = vld [vmem:[%s90 + $0x18] sm:$0xff]
  %v128 = vld [vmem:[%s90 + $0x20] sm:$0xff]
  %v129 = vld [vmem:[%s90 + $0x28] sm:$0xff]
  %v130 = vld [vmem:[%s90 + $0x30] sm:$0xff]
  %v131 = vld [vmem:[%s90 + $0x38] sm:$0xff]
  %v132 = vld [vmem:[%s90 + $0x40] sm:$0xff]
  %v133 = vld [vmem:[%s90 + $0x48] sm:$0xff]
  %v134 = vld [vmem:[%s90 + $0x50] sm:$0xff]
  %v135 = vld [vmem:[%s90 + $0x58] sm:$0xff]
  %v136 = vld [vmem:[%s90 + $0x60] sm:$0xff]
  %v137 = vld [vmem:[%s90 + $0x68] sm:$0xff]
  %v138 = vld [vmem:[%s90 + $0x70] sm:$0xff]
  %v139 = vld [vmem:[%s90 + $0x78] sm:$0xff]
  %v140 = vld [vmem:[%s90 + $0x80] sm:$0xff]
  %v141 = vld [vmem:[%s90 + $0x88] sm:$0xff]
  %v142 = vld [vmem:[%s90 + $0x90] sm:$0xff]
  %v143 = vld [vmem:[%s90 + $0x98] sm:$0xff]
  %v144 = vld [vmem:[%s90 + $0xa0] sm:$0xff]
  %v145 = vld [vmem:[%s90 + $0xa8] sm:$0xff]
  %v146 = vld [vmem:[%s90 + $0xb0] sm:$0xff]
  %v147 = vld [vmem:[%s90 + $0xb8] sm:$0xff]
  %v148 = vld [vmem:[%s90 + $0xc0] sm:$0xff]
  %v149 = vld [vmem:[%s90 + $0xc8] sm:$0xff]
  %v150 = vld [vmem:[%s90 + $0xd0] sm:$0xff]
  %v151 = vld [vmem:[%s90 + $0xd8] sm:$0xff]
  %v152 = vld [vmem:[%s90 + $0xe0] sm:$0xff]
  %v153 = vld [vmem:[%s90 + $0xe8] sm:$0xff]
  %v154 = vld [vmem:[%s90 + $0xf0] sm:$0xff]
  %v155 = vld [vmem:[%s90 + $0xf8] sm:$0xff]
  %v156 = vld [vmem:[%s90 + $0x100] sm:$0xff]
  %v157 = vld [vmem:[%s90 + $0x108] sm:$0xff]
  %v158 = vld [vmem:[%s90 + $0x110] sm:$0xff]
  %v159 = vld [vmem:[%s90 + $0x118] sm:$0xff]
  %v160 = vld [vmem:[%s90 + $0x120] sm:$0xff]
  %v161 = vld [vmem:[%s90 + $0x128] sm:$0xff]
  %v162 = vld [vmem:[%s90 + $0x130] sm:$0xff]
  %v163 = vld [vmem:[%s90 + $0x138] sm:$0xff]
  %v164 = vld [vmem:[%s90 + $0x140] sm:$0xff]
  %v165 = vld [vmem:[%s90 + $0x148] sm:$0xff]
  %v166 = vld [vmem:[%s90 + $0x150] sm:$0xff]
  %v167 = vld [vmem:[%s90 + $0x158] sm:$0xff]
  %v168 = vld [vmem:[%s90 + $0x160] sm:$0xff]
  %v169 = vld [vmem:[%s90 + $0x168] sm:$0xff]
  %v170 = vld [vmem:[%s90 + $0x170] sm:$0xff]
  %v171 = vld [vmem:[%s90 + $0x178] sm:$0xff]
  %v172 = vld [vmem:[%s90 + $0x180] sm:$0xff]
  %v173 = vld [vmem:[%s90 + $0x188] sm:$0xff]
  %v174 = vld [vmem:[%s90 + $0x190] sm:$0xff]
  %v175 = vld [vmem:[%s90 + $0x198] sm:$0xff]
  %v176 = vld [vmem:[%s90 + $0x1a0] sm:$0xff]
  %v177 = vld [vmem:[%s90 + $0x1a8] sm:$0xff]
  %v178 = vld [vmem:[%s90 + $0x1b0] sm:$0xff]
  %v179 = vld [vmem:[%s90 + $0x1b8] sm:$0xff]
  %v180 = vld [vmem:[%s90 + $0x1c0] sm:$0xff]
  %v181 = vld [vmem:[%s90 + $0x1c8] sm:$0xff]
  %v182 = vld [vmem:[%s90 + $0x1d0] sm:$0xff]
  %v183 = vld [vmem:[%s90 + $0x1d8] sm:$0xff]
  %v184 = vld [vmem:[%s90 + $0x1e0] sm:$0xff]
  %v185 = vld [vmem:[%s90 + $0x1e8] sm:$0xff]
  %v186 = vld [vmem:[%s90 + $0x1f0] sm:$0xff]
  %v187 = vld [vmem:[%s90 + $0x1f8] sm:$0xff]
  %v188 = vld [vmem:[%s98] sm:$0xff]
  %v189 = vld [vmem:[%s98 + $0x8] sm:$0xff]
  %v190 = vld [vmem:[%s98 + $0x10] sm:$0xff]
  %v191 = vld [vmem:[%s98 + $0x18] sm:$0xff]
  %v192 = vld [vmem:[%s98 + $0x20] sm:$0xff]
  %v193 = vld [vmem:[%s98 + $0x28] sm:$0xff]
  %v194 = vld [vmem:[%s98 + $0x30] sm:$0xff]
  %v195 = vld [vmem:[%s98 + $0x38] sm:$0xff]
  %v196 = vld [vmem:[%s98 + $0x40] sm:$0xff]
  %v197 = vld [vmem:[%s98 + $0x48] sm:$0xff]
  %v198 = vld [vmem:[%s98 + $0x50] sm:$0xff]
  %v199 = vld [vmem:[%s98 + $0x58] sm:$0xff]
  %v200 = vld [vmem:[%s98 + $0x60] sm:$0xff]
  %v201 = vld [vmem:[%s98 + $0x68] sm:$0xff]
  %v202 = vld [vmem:[%s98 + $0x70] sm:$0xff]
  %v203 = vld [vmem:[%s98 + $0x78] sm:$0xff]
  %v204 = vld [vmem:[%s98 + $0x80] sm:$0xff]
  %v205 = vld [vmem:[%s98 + $0x88] sm:$0xff]
  %v206 = vld [vmem:[%s98 + $0x90] sm:$0xff]
  %v207 = vld [vmem:[%s98 + $0x98] sm:$0xff]
  %v208 = vld [vmem:[%s98 + $0xa0] sm:$0xff]
  %v209 = vld [vmem:[%s98 + $0xa8] sm:$0xff]
  %v210 = vld [vmem:[%s98 + $0xb0] sm:$0xff]
  %v211 = vld [vmem:[%s98 + $0xb8] sm:$0xff]
  %v212 = vld [vmem:[%s98 + $0xc0] sm:$0xff]
  %v213 = vld [vmem:[%s98 + $0xc8] sm:$0xff]
  %v214 = vld [vmem:[%s98 + $0xd0] sm:$0xff]
  %v215 = vld [vmem:[%s98 + $0xd8] sm:$0xff]
  %v216 = vld [vmem:[%s98 + $0xe0] sm:$0xff]
  %v217 = vld [vmem:[%s98 + $0xe8] sm:$0xff]
  %v218 = vld [vmem:[%s98 + $0xf0] sm:$0xff]
  %v219 = vld [vmem:[%s98 + $0xf8] sm:$0xff]
  %v220 = vld [vmem:[%s98 + $0x100] sm:$0xff]
  %v221 = vld [vmem:[%s98 + $0x108] sm:$0xff]
  %v222 = vld [vmem:[%s98 + $0x110] sm:$0xff]
  %v223 = vld [vmem:[%s98 + $0x118] sm:$0xff]
  %v224 = vld [vmem:[%s98 + $0x120] sm:$0xff]
  %v225 = vld [vmem:[%s98 + $0x128] sm:$0xff]
  %v226 = vld [vmem:[%s98 + $0x130] sm:$0xff]
  %v227 = vld [vmem:[%s98 + $0x138] sm:$0xff]
  %v228 = vld [vmem:[%s98 + $0x140] sm:$0xff]
  %v229 = vld [vmem:[%s98 + $0x148] sm:$0xff]
  %v230 = vld [vmem:[%s98 + $0x150] sm:$0xff]
  %v231 = vld [vmem:[%s98 + $0x158] sm:$0xff]
  %v232 = vld [vmem:[%s98 + $0x160] sm:$0xff]
  %v233 = vld [vmem:[%s98 + $0x168] sm:$0xff]
  %v234 = vld [vmem:[%s98 + $0x170] sm:$0xff]
  %v235 = vld [vmem:[%s98 + $0x178] sm:$0xff]
  %v236 = vld [vmem:[%s98 + $0x180] sm:$0xff]
  %v237 = vld [vmem:[%s98 + $0x188] sm:$0xff]
  %v238 = vld [vmem:[%s98 + $0x190] sm:$0xff]
  %v239 = vld [vmem:[%s98 + $0x198] sm:$0xff]
  %v240 = vld [vmem:[%s98 + $0x1a0] sm:$0xff]
  %v241 = vld [vmem:[%s98 + $0x1a8] sm:$0xff]
  %v242 = vld [vmem:[%s98 + $0x1b0] sm:$0xff]
  %v243 = vld [vmem:[%s98 + $0x1b8] sm:$0xff]
  %v244 = vld [vmem:[%s98 + $0x1c0] sm:$0xff]
  %v245 = vld [vmem:[%s98 + $0x1c8] sm:$0xff]
  %v246 = vld [vmem:[%s98 + $0x1d0] sm:$0xff]
  %v247 = vld [vmem:[%s98 + $0x1d8] sm:$0xff]
  %v248 = vld [vmem:[%s98 + $0x1e0] sm:$0xff]
  %v249 = vld [vmem:[%s98 + $0x1e8] sm:$0xff]
  %v250 = vld [vmem:[%s98 + $0x1f0] sm:$0xff]
  %v251 = vld [vmem:[%s98 + $0x1f8] sm:$0xff]
  %v252 = vld [vmem:[%s114] sm:$0xff]
  %v253 = vld [vmem:[%s114 + $0x8] sm:$0xff]
  %v254 = vld [vmem:[%s114 + $0x10] sm:$0xff]
  %v255 = vld [vmem:[%s114 + $0x18] sm:$0xff]
  %v256 = vld [vmem:[%s114 + $0x20] sm:$0xff]
  %v257 = vld [vmem:[%s114 + $0x28] sm:$0xff]
  %v258 = vld [vmem:[%s114 + $0x30] sm:$0xff]
  %v259 = vld [vmem:[%s114 + $0x38] sm:$0xff]
  %v260 = vld [vmem:[%s114 + $0x40] sm:$0xff]
  %v261 = vld [vmem:[%s114 + $0x48] sm:$0xff]
  %v262 = vld [vmem:[%s114 + $0x50] sm:$0xff]
  %v263 = vld [vmem:[%s114 + $0x58] sm:$0xff]
  %v264 = vld [vmem:[%s114 + $0x60] sm:$0xff]
  %v265 = vld [vmem:[%s114 + $0x68] sm:$0xff]
  %v266 = vld [vmem:[%s114 + $0x70] sm:$0xff]
  %v267 = vld [vmem:[%s114 + $0x78] sm:$0xff]
  %v268 = vld [vmem:[%s114 + $0x80] sm:$0xff]
  %v269 = vld [vmem:[%s114 + $0x88] sm:$0xff]
  %v270 = vld [vmem:[%s114 + $0x90] sm:$0xff]
  %v271 = vld [vmem:[%s114 + $0x98] sm:$0xff]
  %v272 = vld [vmem:[%s114 + $0xa0] sm:$0xff]
  %v273 = vld [vmem:[%s114 + $0xa8] sm:$0xff]
  %v274 = vld [vmem:[%s114 + $0xb0] sm:$0xff]
  %v275 = vld [vmem:[%s114 + $0xb8] sm:$0xff]
  %v276 = vld [vmem:[%s114 + $0xc0] sm:$0xff]
  %v277 = vld [vmem:[%s114 + $0xc8] sm:$0xff]
  %v278 = vld [vmem:[%s114 + $0xd0] sm:$0xff]
  %v279 = vld [vmem:[%s114 + $0xd8] sm:$0xff]
  %v280 = vld [vmem:[%s114 + $0xe0] sm:$0xff]
  %v281 = vld [vmem:[%s114 + $0xe8] sm:$0xff]
  %v282 = vld [vmem:[%s114 + $0xf0] sm:$0xff]
  %v283 = vld [vmem:[%s114 + $0xf8] sm:$0xff]
  %v284 = vld [vmem:[%s114 + $0x100] sm:$0xff]
  %v285 = vld [vmem:[%s114 + $0x108] sm:$0xff]
  %v286 = vld [vmem:[%s114 + $0x110] sm:$0xff]
  %v287 = vld [vmem:[%s114 + $0x118] sm:$0xff]
  %v288 = vld [vmem:[%s114 + $0x120] sm:$0xff]
  %v289 = vld [vmem:[%s114 + $0x128] sm:$0xff]
  %v290 = vld [vmem:[%s114 + $0x130] sm:$0xff]
  %v291 = vld [vmem:[%s114 + $0x138] sm:$0xff]
  %v292 = vld [vmem:[%s114 + $0x140] sm:$0xff]
  %v293 = vld [vmem:[%s114 + $0x148] sm:$0xff]
  %v294 = vld [vmem:[%s114 + $0x150] sm:$0xff]
  %v295 = vld [vmem:[%s114 + $0x158] sm:$0xff]
  %v296 = vld [vmem:[%s114 + $0x160] sm:$0xff]
  %v297 = vld [vmem:[%s114 + $0x168] sm:$0xff]
  %v298 = vld [vmem:[%s114 + $0x170] sm:$0xff]
  %v299 = vld [vmem:[%s114 + $0x178] sm:$0xff]
  %v300 = vld [vmem:[%s114 + $0x180] sm:$0xff]
  %v301 = vld [vmem:[%s114 + $0x188] sm:$0xff]
  %v302 = vld [vmem:[%s114 + $0x190] sm:$0xff]
  %v303 = vld [vmem:[%s114 + $0x198] sm:$0xff]
  %v304 = vld [vmem:[%s114 + $0x1a0] sm:$0xff]
  %v305 = vld [vmem:[%s114 + $0x1a8] sm:$0xff]
  %v306 = vld [vmem:[%s114 + $0x1b0] sm:$0xff]
  %v307 = vld [vmem:[%s114 + $0x1b8] sm:$0xff]
  %v308 = vld [vmem:[%s114 + $0x1c0] sm:$0xff]
  %v309 = vld [vmem:[%s114 + $0x1c8] sm:$0xff]
  %v310 = vld [vmem:[%s114 + $0x1d0] sm:$0xff]
  %v311 = vld [vmem:[%s114 + $0x1d8] sm:$0xff]
  %v312 = vld [vmem:[%s114 + $0x1e0] sm:$0xff]
  %v313 = vld [vmem:[%s114 + $0x1e8] sm:$0xff]
  %v314 = vld [vmem:[%s114 + $0x1f0] sm:$0xff]
  %v315 = vld [vmem:[%s114 + $0x1f8] sm:$0xff]
  %317 = vset.pattern.permute.xlu0 0
  %318 = vperm.xlu0 %317, %v252
  %v319 = vpop.permute.xlu0 %318
  %322 = vset.pattern.permute.xlu0 0
  %323 = vperm.xlu0 %322, %v253
  %v324 = vpop.permute.xlu0 %323
  %327 = vset.pattern.permute.xlu0 0
  %328 = vperm.xlu0 %327, %v254
  %v329 = vpop.permute.xlu0 %328
  %332 = vset.pattern.permute.xlu0 0
  %333 = vperm.xlu0 %332, %v255
  %v334 = vpop.permute.xlu0 %333
  %337 = vset.pattern.permute.xlu0 0
  %338 = vperm.xlu0 %337, %v256
  %v339 = vpop.permute.xlu0 %338
  %342 = vset.pattern.permute.xlu0 0
  %343 = vperm.xlu0 %342, %v257
  %v344 = vpop.permute.xlu0 %343
  %347 = vset.pattern.permute.xlu0 0
  %348 = vperm.xlu0 %347, %v258
  %v349 = vpop.permute.xlu0 %348
  %352 = vset.pattern.permute.xlu0 0
  %353 = vperm.xlu0 %352, %v259
  %v354 = vpop.permute.xlu0 %353
  %357 = vset.pattern.permute.xlu0 0
  %358 = vperm.xlu0 %357, %v260
  %v359 = vpop.permute.xlu0 %358
  %362 = vset.pattern.permute.xlu0 0
  %363 = vperm.xlu0 %362, %v261
  %v364 = vpop.permute.xlu0 %363
  %367 = vset.pattern.permute.xlu0 0
  %368 = vperm.xlu0 %367, %v262
  %v369 = vpop.permute.xlu0 %368
  %372 = vset.pattern.permute.xlu0 0
  %373 = vperm.xlu0 %372, %v263
  %v374 = vpop.permute.xlu0 %373
  %377 = vset.pattern.permute.xlu0 0
  %378 = vperm.xlu0 %377, %v264
  %v379 = vpop.permute.xlu0 %378
  %382 = vset.pattern.permute.xlu0 0
  %383 = vperm.xlu0 %382, %v265
  %v384 = vpop.permute.xlu0 %383
  %387 = vset.pattern.permute.xlu0 0
  %388 = vperm.xlu0 %387, %v266
  %v389 = vpop.permute.xlu0 %388
  %392 = vset.pattern.permute.xlu0 0
  %393 = vperm.xlu0 %392, %v267
  %v394 = vpop.permute.xlu0 %393
  %397 = vset.pattern.permute.xlu0 0
  %398 = vperm.xlu0 %397, %v268
  %v399 = vpop.permute.xlu0 %398
  %402 = vset.pattern.permute.xlu0 0
  %403 = vperm.xlu0 %402, %v269
  %v404 = vpop.permute.xlu0 %403
  %407 = vset.pattern.permute.xlu0 0
  %408 = vperm.xlu0 %407, %v270
  %v409 = vpop.permute.xlu0 %408
  %412 = vset.pattern.permute.xlu0 0
  %413 = vperm.xlu0 %412, %v271
  %v414 = vpop.permute.xlu0 %413
  %417 = vset.pattern.permute.xlu0 0
  %418 = vperm.xlu0 %417, %v272
  %v419 = vpop.permute.xlu0 %418
  %422 = vset.pattern.permute.xlu0 0
  %423 = vperm.xlu0 %422, %v273
  %v424 = vpop.permute.xlu0 %423
  %427 = vset.pattern.permute.xlu0 0
  %428 = vperm.xlu0 %427, %v274
  %v429 = vpop.permute.xlu0 %428
  %432 = vset.pattern.permute.xlu0 0
  %433 = vperm.xlu0 %432, %v275
  %v434 = vpop.permute.xlu0 %433
  %437 = vset.pattern.permute.xlu0 0
  %438 = vperm.xlu0 %437, %v276
  %v439 = vpop.permute.xlu0 %438
  %442 = vset.pattern.permute.xlu0 0
  %443 = vperm.xlu0 %442, %v277
  %v444 = vpop.permute.xlu0 %443
  %447 = vset.pattern.permute.xlu0 0
  %448 = vperm.xlu0 %447, %v278
  %v449 = vpop.permute.xlu0 %448
  %452 = vset.pattern.permute.xlu0 0
  %453 = vperm.xlu0 %452, %v279
  %v454 = vpop.permute.xlu0 %453
  %457 = vset.pattern.permute.xlu0 0
  %458 = vperm.xlu0 %457, %v280
  %v459 = vpop.permute.xlu0 %458
  %462 = vset.pattern.permute.xlu0 0
  %463 = vperm.xlu0 %462, %v281
  %v464 = vpop.permute.xlu0 %463
  %467 = vset.pattern.permute.xlu0 0
  %468 = vperm.xlu0 %467, %v282
  %v469 = vpop.permute.xlu0 %468
  %472 = vset.pattern.permute.xlu0 0
  %473 = vperm.xlu0 %472, %v283
  %v474 = vpop.permute.xlu0 %473
  %477 = vset.pattern.permute.xlu0 0
  %478 = vperm.xlu0 %477, %v284
  %v479 = vpop.permute.xlu0 %478
  %482 = vset.pattern.permute.xlu0 0
  %483 = vperm.xlu0 %482, %v285
  %v484 = vpop.permute.xlu0 %483
  %487 = vset.pattern.permute.xlu0 0
  %488 = vperm.xlu0 %487, %v286
  %v489 = vpop.permute.xlu0 %488
  %492 = vset.pattern.permute.xlu0 0
  %493 = vperm.xlu0 %492, %v287
  %v494 = vpop.permute.xlu0 %493
  %497 = vset.pattern.permute.xlu0 0
  %498 = vperm.xlu0 %497, %v288
  %v499 = vpop.permute.xlu0 %498
  %502 = vset.pattern.permute.xlu0 0
  %503 = vperm.xlu0 %502, %v289
  %v504 = vpop.permute.xlu0 %503
  %507 = vset.pattern.permute.xlu0 0
  %508 = vperm.xlu0 %507, %v290
  %v509 = vpop.permute.xlu0 %508
  %512 = vset.pattern.permute.xlu0 0
  %513 = vperm.xlu0 %512, %v291
  %v514 = vpop.permute.xlu0 %513
  %517 = vset.pattern.permute.xlu0 0
  %518 = vperm.xlu0 %517, %v292
  %v519 = vpop.permute.xlu0 %518
  %522 = vset.pattern.permute.xlu0 0
  %523 = vperm.xlu0 %522, %v293
  %v524 = vpop.permute.xlu0 %523
  %527 = vset.pattern.permute.xlu0 0
  %528 = vperm.xlu0 %527, %v294
  %v529 = vpop.permute.xlu0 %528
  %532 = vset.pattern.permute.xlu0 0
  %533 = vperm.xlu0 %532, %v295
  %v534 = vpop.permute.xlu0 %533
  %537 = vset.pattern.permute.xlu0 0
  %538 = vperm.xlu0 %537, %v296
  %v539 = vpop.permute.xlu0 %538
  %542 = vset.pattern.permute.xlu0 0
  %543 = vperm.xlu0 %542, %v297
  %v544 = vpop.permute.xlu0 %543
  %547 = vset.pattern.permute.xlu0 0
  %548 = vperm.xlu0 %547, %v298
  %v549 = vpop.permute.xlu0 %548
  %552 = vset.pattern.permute.xlu0 0
  %553 = vperm.xlu0 %552, %v299
  %v554 = vpop.permute.xlu0 %553
  %557 = vset.pattern.permute.xlu0 0
  %558 = vperm.xlu0 %557, %v300
  %v559 = vpop.permute.xlu0 %558
  %562 = vset.pattern.permute.xlu0 0
  %563 = vperm.xlu0 %562, %v301
  %v564 = vpop.permute.xlu0 %563
  %567 = vset.pattern.permute.xlu0 0
  %568 = vperm.xlu0 %567, %v302
  %v569 = vpop.permute.xlu0 %568
  %572 = vset.pattern.permute.xlu0 0
  %573 = vperm.xlu0 %572, %v303
  %v574 = vpop.permute.xlu0 %573
  %577 = vset.pattern.permute.xlu0 0
  %578 = vperm.xlu0 %577, %v304
  %v579 = vpop.permute.xlu0 %578
  %582 = vset.pattern.permute.xlu0 0
  %583 = vperm.xlu0 %582, %v305
  %v584 = vpop.permute.xlu0 %583
  %587 = vset.pattern.permute.xlu0 0
  %588 = vperm.xlu0 %587, %v306
  %v589 = vpop.permute.xlu0 %588
  %592 = vset.pattern.permute.xlu0 0
  %593 = vperm.xlu0 %592, %v307
  %v594 = vpop.permute.xlu0 %593
  %597 = vset.pattern.permute.xlu0 0
  %598 = vperm.xlu0 %597, %v308
  %v599 = vpop.permute.xlu0 %598
  %602 = vset.pattern.permute.xlu0 0
  %603 = vperm.xlu0 %602, %v309
  %v604 = vpop.permute.xlu0 %603
  %607 = vset.pattern.permute.xlu0 0
  %608 = vperm.xlu0 %607, %v310
  %v609 = vpop.permute.xlu0 %608
  %612 = vset.pattern.permute.xlu0 0
  %613 = vperm.xlu0 %612, %v311
  %v614 = vpop.permute.xlu0 %613
  %617 = vset.pattern.permute.xlu0 0
  %618 = vperm.xlu0 %617, %v312
  %v619 = vpop.permute.xlu0 %618
  %622 = vset.pattern.permute.xlu0 0
  %623 = vperm.xlu0 %622, %v313
  %v624 = vpop.permute.xlu0 %623
  %627 = vset.pattern.permute.xlu0 0
  %628 = vperm.xlu0 %627, %v314
  %v629 = vpop.permute.xlu0 %628
  %632 = vset.pattern.permute.xlu0 0
  %633 = vperm.xlu0 %632, %v315
  %v634 = vpop.permute.xlu0 %633
  %v636 = vmul.f32 %v319, %v124
  %v637 = vmul.f32 %v324, %v125
  %v638 = vmul.f32 %v329, %v126
  %v639 = vmul.f32 %v334, %v127
  %v640 = vmul.f32 %v339, %v128
  %v641 = vmul.f32 %v344, %v129
  %v642 = vmul.f32 %v349, %v130
  %v643 = vmul.f32 %v354, %v131
  %v644 = vmul.f32 %v359, %v132
  %v645 = vmul.f32 %v364, %v133
  %v646 = vmul.f32 %v369, %v134
  %v647 = vmul.f32 %v374, %v135
  %v648 = vmul.f32 %v379, %v136
  %v649 = vmul.f32 %v384, %v137
  %v650 = vmul.f32 %v389, %v138
  %v651 = vmul.f32 %v394, %v139
  %v652 = vmul.f32 %v399, %v140
  %v653 = vmul.f32 %v404, %v141
  %v654 = vmul.f32 %v409, %v142
  %v655 = vmul.f32 %v414, %v143
  %v656 = vmul.f32 %v419, %v144
  %v657 = vmul.f32 %v424, %v145
  %v658 = vmul.f32 %v429, %v146
  %v659 = vmul.f32 %v434, %v147
  %v660 = vmul.f32 %v439, %v148
  %v661 = vmul.f32 %v444, %v149
  %v662 = vmul.f32 %v449, %v150
  %v663 = vmul.f32 %v454, %v151
  %v664 = vmul.f32 %v459, %v152
  %v665 = vmul.f32 %v464, %v153
  %v666 = vmul.f32 %v469, %v154
  %v667 = vmul.f32 %v474, %v155
  %v668 = vmul.f32 %v479, %v156
  %v669 = vmul.f32 %v484, %v157
  %v670 = vmul.f32 %v489, %v158
  %v671 = vmul.f32 %v494, %v159
  %v672 = vmul.f32 %v499, %v160
  %v673 = vmul.f32 %v504, %v161
  %v674 = vmul.f32 %v509, %v162
  %v675 = vmul.f32 %v514, %v163
  %v676 = vmul.f32 %v519, %v164
  %v677 = vmul.f32 %v524, %v165
  %v678 = vmul.f32 %v529, %v166
  %v679 = vmul.f32 %v534, %v167
  %v680 = vmul.f32 %v539, %v168
  %v681 = vmul.f32 %v544, %v169
  %v682 = vmul.f32 %v549, %v170
  %v683 = vmul.f32 %v554, %v171
  %v684 = vmul.f32 %v559, %v172
  %v685 = vmul.f32 %v564, %v173
  %v686 = vmul.f32 %v569, %v174
  %v687 = vmul.f32 %v574, %v175
  %v688 = vmul.f32 %v579, %v176
  %v689 = vmul.f32 %v584, %v177
  %v690 = vmul.f32 %v589, %v178
  %v691 = vmul.f32 %v594, %v179
  %v692 = vmul.f32 %v599, %v180
  %v693 = vmul.f32 %v604, %v181
  %v694 = vmul.f32 %v609, %v182
  %v695 = vmul.f32 %v614, %v183
  %v696 = vmul.f32 %v619, %v184
  %v697 = vmul.f32 %v624, %v185
  %v698 = vmul.f32 %v629, %v186
  %v699 = vmul.f32 %v634, %v187
  %700 = vset.pattern.permute.xlu0 1
  %701 = vperm.xlu0 %700, %v252
  %v702 = vpop.permute.xlu0 %701
  %704 = vset.pattern.permute.xlu0 1
  %705 = vperm.xlu0 %704, %v253
  %v706 = vpop.permute.xlu0 %705
  %708 = vset.pattern.permute.xlu0 1
  %709 = vperm.xlu0 %708, %v254
  %v710 = vpop.permute.xlu0 %709
  %712 = vset.pattern.permute.xlu0 1
  %713 = vperm.xlu0 %712, %v255
  %v714 = vpop.permute.xlu0 %713
  %716 = vset.pattern.permute.xlu0 1
  %717 = vperm.xlu0 %716, %v256
  %v718 = vpop.permute.xlu0 %717
  %720 = vset.pattern.permute.xlu0 1
  %721 = vperm.xlu0 %720, %v257
  %v722 = vpop.permute.xlu0 %721
  %724 = vset.pattern.permute.xlu0 1
  %725 = vperm.xlu0 %724, %v258
  %v726 = vpop.permute.xlu0 %725
  %728 = vset.pattern.permute.xlu0 1
  %729 = vperm.xlu0 %728, %v259
  %v730 = vpop.permute.xlu0 %729
  %732 = vset.pattern.permute.xlu0 1
  %733 = vperm.xlu0 %732, %v260
  %v734 = vpop.permute.xlu0 %733
  %736 = vset.pattern.permute.xlu0 1
  %737 = vperm.xlu0 %736, %v261
  %v738 = vpop.permute.xlu0 %737
  %740 = vset.pattern.permute.xlu0 1
  %741 = vperm.xlu0 %740, %v262
  %v742 = vpop.permute.xlu0 %741
  %744 = vset.pattern.permute.xlu0 1
  %745 = vperm.xlu0 %744, %v263
  %v746 = vpop.permute.xlu0 %745
  %748 = vset.pattern.permute.xlu0 1
  %749 = vperm.xlu0 %748, %v264
  %v750 = vpop.permute.xlu0 %749
  %752 = vset.pattern.permute.xlu0 1
  %753 = vperm.xlu0 %752, %v265
  %v754 = vpop.permute.xlu0 %753
  %756 = vset.pattern.permute.xlu0 1
  %757 = vperm.xlu0 %756, %v266
  %v758 = vpop.permute.xlu0 %757
  %760 = vset.pattern.permute.xlu0 1
  %761 = vperm.xlu0 %760, %v267
  %v762 = vpop.permute.xlu0 %761
  %764 = vset.pattern.permute.xlu0 1
  %765 = vperm.xlu0 %764, %v268
  %v766 = vpop.permute.xlu0 %765
  %768 = vset.pattern.permute.xlu0 1
  %769 = vperm.xlu0 %768, %v269
  %v770 = vpop.permute.xlu0 %769
  %772 = vset.pattern.permute.xlu0 1
  %773 = vperm.xlu0 %772, %v270
  %v774 = vpop.permute.xlu0 %773
  %776 = vset.pattern.permute.xlu0 1
  %777 = vperm.xlu0 %776, %v271
  %v778 = vpop.permute.xlu0 %777
  %780 = vset.pattern.permute.xlu0 1
  %781 = vperm.xlu0 %780, %v272
  %v782 = vpop.permute.xlu0 %781
  %784 = vset.pattern.permute.xlu0 1
  %785 = vperm.xlu0 %784, %v273
  %v786 = vpop.permute.xlu0 %785
  %788 = vset.pattern.permute.xlu0 1
  %789 = vperm.xlu0 %788, %v274
  %v790 = vpop.permute.xlu0 %789
  %792 = vset.pattern.permute.xlu0 1
  %793 = vperm.xlu0 %792, %v275
  %v794 = vpop.permute.xlu0 %793
  %796 = vset.pattern.permute.xlu0 1
  %797 = vperm.xlu0 %796, %v276
  %v798 = vpop.permute.xlu0 %797
  %800 = vset.pattern.permute.xlu0 1
  %801 = vperm.xlu0 %800, %v277
  %v802 = vpop.permute.xlu0 %801
  %804 = vset.pattern.permute.xlu0 1
  %805 = vperm.xlu0 %804, %v278
  %v806 = vpop.permute.xlu0 %805
  %808 = vset.pattern.permute.xlu0 1
  %809 = vperm.xlu0 %808, %v279
  %v810 = vpop.permute.xlu0 %809
  %812 = vset.pattern.permute.xlu0 1
  %813 = vperm.xlu0 %812, %v280
  %v814 = vpop.permute.xlu0 %813
  %816 = vset.pattern.permute.xlu0 1
  %817 = vperm.xlu0 %816, %v281
  %v818 = vpop.permute.xlu0 %817
  %820 = vset.pattern.permute.xlu0 1
  %821 = vperm.xlu0 %820, %v282
  %v822 = vpop.permute.xlu0 %821
  %824 = vset.pattern.permute.xlu0 1
  %825 = vperm.xlu0 %824, %v283
  %v826 = vpop.permute.xlu0 %825
  %828 = vset.pattern.permute.xlu0 1
  %829 = vperm.xlu0 %828, %v284
  %v830 = vpop.permute.xlu0 %829
  %832 = vset.pattern.permute.xlu0 1
  %833 = vperm.xlu0 %832, %v285
  %v834 = vpop.permute.xlu0 %833
  %836 = vset.pattern.permute.xlu0 1
  %837 = vperm.xlu0 %836, %v286
  %v838 = vpop.permute.xlu0 %837
  %840 = vset.pattern.permute.xlu0 1
  %841 = vperm.xlu0 %840, %v287
  %v842 = vpop.permute.xlu0 %841
  %844 = vset.pattern.permute.xlu0 1
  %845 = vperm.xlu0 %844, %v288
  %v846 = vpop.permute.xlu0 %845
  %848 = vset.pattern.permute.xlu0 1
  %849 = vperm.xlu0 %848, %v289
  %v850 = vpop.permute.xlu0 %849
  %852 = vset.pattern.permute.xlu0 1
  %853 = vperm.xlu0 %852, %v290
  %v854 = vpop.permute.xlu0 %853
  %856 = vset.pattern.permute.xlu0 1
  %857 = vperm.xlu0 %856, %v291
  %v858 = vpop.permute.xlu0 %857
  %860 = vset.pattern.permute.xlu0 1
  %861 = vperm.xlu0 %860, %v292
  %v862 = vpop.permute.xlu0 %861
  %864 = vset.pattern.permute.xlu0 1
  %865 = vperm.xlu0 %864, %v293
  %v866 = vpop.permute.xlu0 %865
  %868 = vset.pattern.permute.xlu0 1
  %869 = vperm.xlu0 %868, %v294
  %v870 = vpop.permute.xlu0 %869
  %872 = vset.pattern.permute.xlu0 1
  %873 = vperm.xlu0 %872, %v295
  %v874 = vpop.permute.xlu0 %873
  %876 = vset.pattern.permute.xlu0 1
  %877 = vperm.xlu0 %876, %v296
  %v878 = vpop.permute.xlu0 %877
  %880 = vset.pattern.permute.xlu0 1
  %881 = vperm.xlu0 %880, %v297
  %v882 = vpop.permute.xlu0 %881
  %884 = vset.pattern.permute.xlu0 1
  %885 = vperm.xlu0 %884, %v298
  %v886 = vpop.permute.xlu0 %885
  %888 = vset.pattern.permute.xlu0 1
  %889 = vperm.xlu0 %888, %v299
  %v890 = vpop.permute.xlu0 %889
  %892 = vset.pattern.permute.xlu0 1
  %893 = vperm.xlu0 %892, %v300
  %v894 = vpop.permute.xlu0 %893
  %896 = vset.pattern.permute.xlu0 1
  %897 = vperm.xlu0 %896, %v301
  %v898 = vpop.permute.xlu0 %897
  %900 = vset.pattern.permute.xlu0 1
  %901 = vperm.xlu0 %900, %v302
  %v902 = vpop.permute.xlu0 %901
  %904 = vset.pattern.permute.xlu0 1
  %905 = vperm.xlu0 %904, %v303
  %v906 = vpop.permute.xlu0 %905
  %908 = vset.pattern.permute.xlu0 1
  %909 = vperm.xlu0 %908, %v304
  %v910 = vpop.permute.xlu0 %909
  %912 = vset.pattern.permute.xlu0 1
  %913 = vperm.xlu0 %912, %v305
  %v914 = vpop.permute.xlu0 %913
  %916 = vset.pattern.permute.xlu0 1
  %917 = vperm.xlu0 %916, %v306
  %v918 = vpop.permute.xlu0 %917
  %920 = vset.pattern.permute.xlu0 1
  %921 = vperm.xlu0 %920, %v307
  %v922 = vpop.permute.xlu0 %921
  %924 = vset.pattern.permute.xlu0 1
  %925 = vperm.xlu0 %924, %v308
  %v926 = vpop.permute.xlu0 %925
  %928 = vset.pattern.permute.xlu0 1
  %929 = vperm.xlu0 %928, %v309
  %v930 = vpop.permute.xlu0 %929
  %932 = vset.pattern.permute.xlu0 1
  %933 = vperm.xlu0 %932, %v310
  %v934 = vpop.permute.xlu0 %933
  %936 = vset.pattern.permute.xlu0 1
  %937 = vperm.xlu0 %936, %v311
  %v938 = vpop.permute.xlu0 %937
  %940 = vset.pattern.permute.xlu0 1
  %941 = vperm.xlu0 %940, %v312
  %v942 = vpop.permute.xlu0 %941
  %944 = vset.pattern.permute.xlu0 1
  %945 = vperm.xlu0 %944, %v313
  %v946 = vpop.permute.xlu0 %945
  %948 = vset.pattern.permute.xlu0 1
  %949 = vperm.xlu0 %948, %v314
  %v950 = vpop.permute.xlu0 %949
  %952 = vset.pattern.permute.xlu0 1
  %953 = vperm.xlu0 %952, %v315
  %v954 = vpop.permute.xlu0 %953
  %v956 = vmul.f32 %v702, %v188
  %v957 = vmul.f32 %v706, %v189
  %v958 = vmul.f32 %v710, %v190
  %v959 = vmul.f32 %v714, %v191
  %v960 = vmul.f32 %v718, %v192
  %v961 = vmul.f32 %v722, %v193
  %v962 = vmul.f32 %v726, %v194
  %v963 = vmul.f32 %v730, %v195
  %v964 = vmul.f32 %v734, %v196
  %v965 = vmul.f32 %v738, %v197
  %v966 = vmul.f32 %v742, %v198
  %v967 = vmul.f32 %v746, %v199
  %v968 = vmul.f32 %v750, %v200
  %v969 = vmul.f32 %v754, %v201
  %v970 = vmul.f32 %v758, %v202
  %v971 = vmul.f32 %v762, %v203
  %v972 = vmul.f32 %v766, %v204
  %v973 = vmul.f32 %v770, %v205
  %v974 = vmul.f32 %v774, %v206
  %v975 = vmul.f32 %v778, %v207
  %v976 = vmul.f32 %v782, %v208
  %v977 = vmul.f32 %v786, %v209
  %v978 = vmul.f32 %v790, %v210
  %v979 = vmul.f32 %v794, %v211
  %v980 = vmul.f32 %v798, %v212
  %v981 = vmul.f32 %v802, %v213
  %v982 = vmul.f32 %v806, %v214
  %v983 = vmul.f32 %v810, %v215
  %v984 = vmul.f32 %v814, %v216
  %v985 = vmul.f32 %v818, %v217
  %v986 = vmul.f32 %v822, %v218
  %v987 = vmul.f32 %v826, %v219
  %v988 = vmul.f32 %v830, %v220
  %v989 = vmul.f32 %v834, %v221
  %v990 = vmul.f32 %v838, %v222
  %v991 = vmul.f32 %v842, %v223
  %v992 = vmul.f32 %v846, %v224
  %v993 = vmul.f32 %v850, %v225
  %v994 = vmul.f32 %v854, %v226
  %v995 = vmul.f32 %v858, %v227
  %v996 = vmul.f32 %v862, %v228
  %v997 = vmul.f32 %v866, %v229
  %v998 = vmul.f32 %v870, %v230
  %v999 = vmul.f32 %v874, %v231
  %v1000 = vmul.f32 %v878, %v232
  %v1001 = vmul.f32 %v882, %v233
  %v1002 = vmul.f32 %v886, %v234
  %v1003 = vmul.f32 %v890, %v235
  %v1004 = vmul.f32 %v894, %v236
  %v1005 = vmul.f32 %v898, %v237
  %v1006 = vmul.f32 %v902, %v238
  %v1007 = vmul.f32 %v906, %v239
  %v1008 = vmul.f32 %v910, %v240
  %v1009 = vmul.f32 %v914, %v241
  %v1010 = vmul.f32 %v918, %v242
  %v1011 = vmul.f32 %v922, %v243
  %v1012 = vmul.f32 %v926, %v244
  %v1013 = vmul.f32 %v930, %v245
  %v1014 = vmul.f32 %v934, %v246
  %v1015 = vmul.f32 %v938, %v247
  %v1016 = vmul.f32 %v942, %v248
  %v1017 = vmul.f32 %v946, %v249
  %v1018 = vmul.f32 %v950, %v250
  %v1019 = vmul.f32 %v954, %v251
  %v1020 = vadd.f32 %v636, %v956
  %v1021 = vadd.f32 %v637, %v957
  %v1022 = vadd.f32 %v638, %v958
  %v1023 = vadd.f32 %v639, %v959
  %v1024 = vadd.f32 %v640, %v960
  %v1025 = vadd.f32 %v641, %v961
  %v1026 = vadd.f32 %v642, %v962
  %v1027 = vadd.f32 %v643, %v963
  %v1028 = vadd.f32 %v644, %v964
  %v1029 = vadd.f32 %v645, %v965
  %v1030 = vadd.f32 %v646, %v966
  %v1031 = vadd.f32 %v647, %v967
  %v1032 = vadd.f32 %v648, %v968
  %v1033 = vadd.f32 %v649, %v969
  %v1034 = vadd.f32 %v650, %v970
  %v1035 = vadd.f32 %v651, %v971
  %v1036 = vadd.f32 %v652, %v972
  %v1037 = vadd.f32 %v653, %v973
  %v1038 = vadd.f32 %v654, %v974
  %v1039 = vadd.f32 %v655, %v975
  %v1040 = vadd.f32 %v656, %v976
  %v1041 = vadd.f32 %v657, %v977
  %v1042 = vadd.f32 %v658, %v978
  %v1043 = vadd.f32 %v659, %v979
  %v1044 = vadd.f32 %v660, %v980
  %v1045 = vadd.f32 %v661, %v981
  %v1046 = vadd.f32 %v662, %v982
  %v1047 = vadd.f32 %v663, %v983
  %v1048 = vadd.f32 %v664, %v984
  %v1049 = vadd.f32 %v665, %v985
  %v1050 = vadd.f32 %v666, %v986
  %v1051 = vadd.f32 %v667, %v987
  %v1052 = vadd.f32 %v668, %v988
  %v1053 = vadd.f32 %v669, %v989
  %v1054 = vadd.f32 %v670, %v990
  %v1055 = vadd.f32 %v671, %v991
  %v1056 = vadd.f32 %v672, %v992
  %v1057 = vadd.f32 %v673, %v993
  %v1058 = vadd.f32 %v674, %v994
  %v1059 = vadd.f32 %v675, %v995
  %v1060 = vadd.f32 %v676, %v996
  %v1061 = vadd.f32 %v677, %v997
  %v1062 = vadd.f32 %v678, %v998
  %v1063 = vadd.f32 %v679, %v999
  %v1064 = vadd.f32 %v680, %v1000
  %v1065 = vadd.f32 %v681, %v1001
  %v1066 = vadd.f32 %v682, %v1002
  %v1067 = vadd.f32 %v683, %v1003
  %v1068 = vadd.f32 %v684, %v1004
  %v1069 = vadd.f32 %v685, %v1005
  %v1070 = vadd.f32 %v686, %v1006
  %v1071 = vadd.f32 %v687, %v1007
  %v1072 = vadd.f32 %v688, %v1008
  %v1073 = vadd.f32 %v689, %v1009
  %v1074 = vadd.f32 %v690, %v1010
  %v1075 = vadd.f32 %v691, %v1011
  %v1076 = vadd.f32 %v692, %v1012
  %v1077 = vadd.f32 %v693, %v1013
  %v1078 = vadd.f32 %v694, %v1014
  %v1079 = vadd.f32 %v695, %v1015
  %v1080 = vadd.f32 %v696, %v1016
  %v1081 = vadd.f32 %v697, %v1017
  %v1082 = vadd.f32 %v698, %v1018
  %v1083 = vadd.f32 %v699, %v1019
  %v1084 = vpack.c.bf16 %v1020, %v1020
  %v1085 = vpack.c.bf16 %v1021, %v1021
  %v1086 = vpack.c.bf16 %v1022, %v1022
  %v1087 = vpack.c.bf16 %v1023, %v1023
  %v1088 = vpack.c.bf16 %v1024, %v1024
  %v1089 = vpack.c.bf16 %v1025, %v1025
  %v1090 = vpack.c.bf16 %v1026, %v1026
  %v1091 = vpack.c.bf16 %v1027, %v1027
  %v1092 = vpack.c.bf16 %v1028, %v1028
  %v1093 = vpack.c.bf16 %v1029, %v1029
  %v1094 = vpack.c.bf16 %v1030, %v1030
  %v1095 = vpack.c.bf16 %v1031, %v1031
  %v1096 = vpack.c.bf16 %v1032, %v1032
  %v1097 = vpack.c.bf16 %v1033, %v1033
  %v1098 = vpack.c.bf16 %v1034, %v1034
  %v1099 = vpack.c.bf16 %v1035, %v1035
  %v1100 = vpack.c.bf16 %v1036, %v1036
  %v1101 = vpack.c.bf16 %v1037, %v1037
  %v1102 = vpack.c.bf16 %v1038, %v1038
  %v1103 = vpack.c.bf16 %v1039, %v1039
  %v1104 = vpack.c.bf16 %v1040, %v1040
  %v1105 = vpack.c.bf16 %v1041, %v1041
  %v1106 = vpack.c.bf16 %v1042, %v1042
  %v1107 = vpack.c.bf16 %v1043, %v1043
  %v1108 = vpack.c.bf16 %v1044, %v1044
  %v1109 = vpack.c.bf16 %v1045, %v1045
  %v1110 = vpack.c.bf16 %v1046, %v1046
  %v1111 = vpack.c.bf16 %v1047, %v1047
  %v1112 = vpack.c.bf16 %v1048, %v1048
  %v1113 = vpack.c.bf16 %v1049, %v1049
  %v1114 = vpack.c.bf16 %v1050, %v1050
  %v1115 = vpack.c.bf16 %v1051, %v1051
  %v1116 = vpack.c.bf16 %v1052, %v1052
  %v1117 = vpack.c.bf16 %v1053, %v1053
  %v1118 = vpack.c.bf16 %v1054, %v1054
  %v1119 = vpack.c.bf16 %v1055, %v1055
  %v1120 = vpack.c.bf16 %v1056, %v1056
  %v1121 = vpack.c.bf16 %v1057, %v1057
  %v1122 = vpack.c.bf16 %v1058, %v1058
  %v1123 = vpack.c.bf16 %v1059, %v1059
  %v1124 = vpack.c.bf16 %v1060, %v1060
  %v1125 = vpack.c.bf16 %v1061, %v1061
  %v1126 = vpack.c.bf16 %v1062, %v1062
  %v1127 = vpack.c.bf16 %v1063, %v1063
  %v1128 = vpack.c.bf16 %v1064, %v1064
  %v1129 = vpack.c.bf16 %v1065, %v1065
  %v1130 = vpack.c.bf16 %v1066, %v1066
  %v1131 = vpack.c.bf16 %v1067, %v1067
  %v1132 = vpack.c.bf16 %v1068, %v1068
  %v1133 = vpack.c.bf16 %v1069, %v1069
  %v1134 = vpack.c.bf16 %v1070, %v1070
  %v1135 = vpack.c.bf16 %v1071, %v1071
  %v1136 = vpack.c.bf16 %v1072, %v1072
  %v1137 = vpack.c.bf16 %v1073, %v1073
  %v1138 = vpack.c.bf16 %v1074, %v1074
  %v1139 = vpack.c.bf16 %v1075, %v1075
  %v1140 = vpack.c.bf16 %v1076, %v1076
  %v1141 = vpack.c.bf16 %v1077, %v1077
  %v1142 = vpack.c.bf16 %v1078, %v1078
  %v1143 = vpack.c.bf16 %v1079, %v1079
  %v1144 = vpack.c.bf16 %v1080, %v1080
  %v1145 = vpack.c.bf16 %v1081, %v1081
  %v1146 = vpack.c.bf16 %v1082, %v1082
  %v1147 = vpack.c.bf16 %v1083, %v1083
  %vm1148 = vcmask 257024
  %1149 = vst.msk [vmem:[#allocation2] sm:$0xf] %vm1148, %v1084
  %1150 = vst.msk [vmem:[#allocation2 + $0x4] sm:$0xf] %vm1148, %v1085
  %1151 = vst.msk [vmem:[#allocation2 + $0x8] sm:$0xf] %vm1148, %v1086
  %1152 = vst.msk [vmem:[#allocation2 + $0xc] sm:$0xf] %vm1148, %v1087
  %1153 = vst.msk [vmem:[#allocation2 + $0x10] sm:$0xf] %vm1148, %v1088
  %1154 = vst.msk [vmem:[#allocation2 + $0x14] sm:$0xf] %vm1148, %v1089
  %1155 = vst.msk [vmem:[#allocation2 + $0x18] sm:$0xf] %vm1148, %v1090
  %1156 = vst.msk [vmem:[#allocation2 + $0x1c] sm:$0xf] %vm1148, %v1091
  %1157 = vst.msk [vmem:[#allocation2 + $0x20] sm:$0xf] %vm1148, %v1092
  %1158 = vst.msk [vmem:[#allocation2 + $0x24] sm:$0xf] %vm1148, %v1093
  %1159 = vst.msk [vmem:[#allocation2 + $0x28] sm:$0xf] %vm1148, %v1094
  %1160 = vst.msk [vmem:[#allocation2 + $0x2c] sm:$0xf] %vm1148, %v1095
  %1161 = vst.msk [vmem:[#allocation2 + $0x30] sm:$0xf] %vm1148, %v1096
  %1162 = vst.msk [vmem:[#allocation2 + $0x34] sm:$0xf] %vm1148, %v1097
  %1163 = vst.msk [vmem:[#allocation2 + $0x38] sm:$0xf] %vm1148, %v1098
  %1164 = vst.msk [vmem:[#allocation2 + $0x3c] sm:$0xf] %vm1148, %v1099
  %1165 = vst.msk [vmem:[#allocation2 + $0x40] sm:$0xf] %vm1148, %v1100
  %1166 = vst.msk [vmem:[#allocation2 + $0x44] sm:$0xf] %vm1148, %v1101
  %1167 = vst.msk [vmem:[#allocation2 + $0x48] sm:$0xf] %vm1148, %v1102
  %1168 = vst.msk [vmem:[#allocation2 + $0x4c] sm:$0xf] %vm1148, %v1103
  %1169 = vst.msk [vmem:[#allocation2 + $0x50] sm:$0xf] %vm1148, %v1104
  %1170 = vst.msk [vmem:[#allocation2 + $0x54] sm:$0xf] %vm1148, %v1105
  %1171 = vst.msk [vmem:[#allocation2 + $0x58] sm:$0xf] %vm1148, %v1106
  %1172 = vst.msk [vmem:[#allocation2 + $0x5c] sm:$0xf] %vm1148, %v1107
  %1173 = vst.msk [vmem:[#allocation2 + $0x60] sm:$0xf] %vm1148, %v1108
  %1174 = vst.msk [vmem:[#allocation2 + $0x64] sm:$0xf] %vm1148, %v1109
  %1175 = vst.msk [vmem:[#allocation2 + $0x68] sm:$0xf] %vm1148, %v1110
  %1176 = vst.msk [vmem:[#allocation2 + $0x6c] sm:$0xf] %vm1148, %v1111
  %1177 = vst.msk [vmem:[#allocation2 + $0x70] sm:$0xf] %vm1148, %v1112
  %1178 = vst.msk [vmem:[#allocation2 + $0x74] sm:$0xf] %vm1148, %v1113
  %1179 = vst.msk [vmem:[#allocation2 + $0x78] sm:$0xf] %vm1148, %v1114
  %1180 = vst.msk [vmem:[#allocation2 + $0x7c] sm:$0xf] %vm1148, %v1115
  %1181 = vst.msk [vmem:[#allocation2 + $0x80] sm:$0xf] %vm1148, %v1116
  %1182 = vst.msk [vmem:[#allocation2 + $0x84] sm:$0xf] %vm1148, %v1117
  %1183 = vst.msk [vmem:[#allocation2 + $0x88] sm:$0xf] %vm1148, %v1118
  %1184 = vst.msk [vmem:[#allocation2 + $0x8c] sm:$0xf] %vm1148, %v1119
  %1185 = vst.msk [vmem:[#allocation2 + $0x90] sm:$0xf] %vm1148, %v1120
  %1186 = vst.msk [vmem:[#allocation2 + $0x94] sm:$0xf] %vm1148, %v1121
  %1187 = vst.msk [vmem:[#allocation2 + $0x98] sm:$0xf] %vm1148, %v1122
  %1188 = vst.msk [vmem:[#allocation2 + $0x9c] sm:$0xf] %vm1148, %v1123
  %1189 = vst.msk [vmem:[#allocation2 + $0xa0] sm:$0xf] %vm1148, %v1124
  %1190 = vst.msk [vmem:[#allocation2 + $0xa4] sm:$0xf] %vm1148, %v1125
  %1191 = vst.msk [vmem:[#allocation2 + $0xa8] sm:$0xf] %vm1148, %v1126
  %1192 = vst.msk [vmem:[#allocation2 + $0xac] sm:$0xf] %vm1148, %v1127
  %1193 = vst.msk [vmem:[#allocation2 + $0xb0] sm:$0xf] %vm1148, %v1128
  %1194 = vst.msk [vmem:[#allocation2 + $0xb4] sm:$0xf] %vm1148, %v1129
  %1195 = vst.msk [vmem:[#allocation2 + $0xb8] sm:$0xf] %vm1148, %v1130
  %1196 = vst.msk [vmem:[#allocation2 + $0xbc] sm:$0xf] %vm1148, %v1131
  %1197 = vst.msk [vmem:[#allocation2 + $0xc0] sm:$0xf] %vm1148, %v1132
  %1198 = vst.msk [vmem:[#allocation2 + $0xc4] sm:$0xf] %vm1148, %v1133
  %1199 = vst.msk [vmem:[#allocation2 + $0xc8] sm:$0xf] %vm1148, %v1134
  %1200 = vst.msk [vmem:[#allocation2 + $0xcc] sm:$0xf] %vm1148, %v1135
  %1201 = vst.msk [vmem:[#allocation2 + $0xd0] sm:$0xf] %vm1148, %v1136
  %1202 = vst.msk [vmem:[#allocation2 + $0xd4] sm:$0xf] %vm1148, %v1137
  %1203 = vst.msk [vmem:[#allocation2 + $0xd8] sm:$0xf] %vm1148, %v1138
  %1204 = vst.msk [vmem:[#allocation2 + $0xdc] sm:$0xf] %vm1148, %v1139
  %1205 = vst.msk [vmem:[#allocation2 + $0xe0] sm:$0xf] %vm1148, %v1140
  %1206 = vst.msk [vmem:[#allocation2 + $0xe4] sm:$0xf] %vm1148, %v1141
  %1207 = vst.msk [vmem:[#allocation2 + $0xe8] sm:$0xf] %vm1148, %v1142
  %1208 = vst.msk [vmem:[#allocation2 + $0xec] sm:$0xf] %vm1148, %v1143
  %1209 = vst.msk [vmem:[#allocation2 + $0xf0] sm:$0xf] %vm1148, %v1144
  %1210 = vst.msk [vmem:[#allocation2 + $0xf4] sm:$0xf] %vm1148, %v1145
  %1211 = vst.msk [vmem:[#allocation2 + $0xf8] sm:$0xf] %vm1148, %v1146
  %1212 = vst.msk [vmem:[#allocation2 + $0xfc] sm:$0xf] %vm1148, %v1147
  %v1213 = vld [vmem:[%s106] sm:$0xf]
  %v1214 = vld [vmem:[%s106 + $0x4] sm:$0xf]
  %v1215 = vld [vmem:[%s106 + $0x8] sm:$0xf]
  %v1216 = vld [vmem:[%s106 + $0xc] sm:$0xf]
  %v1217 = vld [vmem:[%s106 + $0x10] sm:$0xf]
  %v1218 = vld [vmem:[%s106 + $0x14] sm:$0xf]
  %v1219 = vld [vmem:[%s106 + $0x18] sm:$0xf]
  %v1220 = vld [vmem:[%s106 + $0x1c] sm:$0xf]
  %v1221 = vld [vmem:[%s106 + $0x20] sm:$0xf]
  %v1222 = vld [vmem:[%s106 + $0x24] sm:$0xf]
  %v1223 = vld [vmem:[%s106 + $0x28] sm:$0xf]
  %v1224 = vld [vmem:[%s106 + $0x2c] sm:$0xf]
  %v1225 = vld [vmem:[%s106 + $0x30] sm:$0xf]
  %v1226 = vld [vmem:[%s106 + $0x34] sm:$0xf]
  %v1227 = vld [vmem:[%s106 + $0x38] sm:$0xf]
  %v1228 = vld [vmem:[%s106 + $0x3c] sm:$0xf]
  %v1229 = vld [vmem:[%s106 + $0x40] sm:$0xf]
  %v1230 = vld [vmem:[%s106 + $0x44] sm:$0xf]
  %v1231 = vld [vmem:[%s106 + $0x48] sm:$0xf]
  %v1232 = vld [vmem:[%s106 + $0x4c] sm:$0xf]
  %v1233 = vld [vmem:[%s106 + $0x50] sm:$0xf]
  %v1234 = vld [vmem:[%s106 + $0x54] sm:$0xf]
  %v1235 = vld [vmem:[%s106 + $0x58] sm:$0xf]
  %v1236 = vld [vmem:[%s106 + $0x5c] sm:$0xf]
  %v1237 = vld [vmem:[%s106 + $0x60] sm:$0xf]
  %v1238 = vld [vmem:[%s106 + $0x64] sm:$0xf]
  %v1239 = vld [vmem:[%s106 + $0x68] sm:$0xf]
  %v1240 = vld [vmem:[%s106 + $0x6c] sm:$0xf]
  %v1241 = vld [vmem:[%s106 + $0x70] sm:$0xf]
  %v1242 = vld [vmem:[%s106 + $0x74] sm:$0xf]
  %v1243 = vld [vmem:[%s106 + $0x78] sm:$0xf]
  %v1244 = vld [vmem:[%s106 + $0x7c] sm:$0xf]
  %v1245 = vld [vmem:[%s106 + $0x80] sm:$0xf]
  %v1246 = vld [vmem:[%s106 + $0x84] sm:$0xf]
  %v1247 = vld [vmem:[%s106 + $0x88] sm:$0xf]
  %v1248 = vld [vmem:[%s106 + $0x8c] sm:$0xf]
  %v1249 = vld [vmem:[%s106 + $0x90] sm:$0xf]
  %v1250 = vld [vmem:[%s106 + $0x94] sm:$0xf]
  %v1251 = vld [vmem:[%s106 + $0x98] sm:$0xf]
  %v1252 = vld [vmem:[%s106 + $0x9c] sm:$0xf]
  %v1253 = vld [vmem:[%s106 + $0xa0] sm:$0xf]
  %v1254 = vld [vmem:[%s106 + $0xa4] sm:$0xf]
  %v1255 = vld [vmem:[%s106 + $0xa8] sm:$0xf]
  %v1256 = vld [vmem:[%s106 + $0xac] sm:$0xf]
  %v1257 = vld [vmem:[%s106 + $0xb0] sm:$0xf]
  %v1258 = vld [vmem:[%s106 + $0xb4] sm:$0xf]
  %v1259 = vld [vmem:[%s106 + $0xb8] sm:$0xf]
  %v1260 = vld [vmem:[%s106 + $0xbc] sm:$0xf]
  %v1261 = vld [vmem:[%s106 + $0xc0] sm:$0xf]
  %v1262 = vld [vmem:[%s106 + $0xc4] sm:$0xf]
  %v1263 = vld [vmem:[%s106 + $0xc8] sm:$0xf]
  %v1264 = vld [vmem:[%s106 + $0xcc] sm:$0xf]
  %v1265 = vld [vmem:[%s106 + $0xd0] sm:$0xf]
  %v1266 = vld [vmem:[%s106 + $0xd4] sm:$0xf]
  %v1267 = vld [vmem:[%s106 + $0xd8] sm:$0xf]
  %v1268 = vld [vmem:[%s106 + $0xdc] sm:$0xf]
  %v1269 = vld [vmem:[%s106 + $0xe0] sm:$0xf]
  %v1270 = vld [vmem:[%s106 + $0xe4] sm:$0xf]
  %v1271 = vld [vmem:[%s106 + $0xe8] sm:$0xf]
  %v1272 = vld [vmem:[%s106 + $0xec] sm:$0xf]
  %v1273 = vld [vmem:[%s106 + $0xf0] sm:$0xf]
  %v1274 = vld [vmem:[%s106 + $0xf4] sm:$0xf]
  %v1275 = vld [vmem:[%s106 + $0xf8] sm:$0xf]
  %v1276 = vld [vmem:[%s106 + $0xfc] sm:$0xf]
  %1341 = vrot.lane.b32.xlu0 %v1213, 32
  %v1342 = vpop.permute.xlu0 %1341
  %1343 = vrot.lane.b32.xlu0 %v1214, 32
  %v1344 = vpop.permute.xlu0 %1343
  %1345 = vrot.lane.b32.xlu0 %v1215, 32
  %v1346 = vpop.permute.xlu0 %1345
  %1347 = vrot.lane.b32.xlu0 %v1216, 32
  %v1348 = vpop.permute.xlu0 %1347
  %1349 = vrot.lane.b32.xlu0 %v1217, 32
  %v1350 = vpop.permute.xlu0 %1349
  %1351 = vrot.lane.b32.xlu0 %v1218, 32
  %v1352 = vpop.permute.xlu0 %1351
  %1353 = vrot.lane.b32.xlu0 %v1219, 32
  %v1354 = vpop.permute.xlu0 %1353
  %1355 = vrot.lane.b32.xlu0 %v1220, 32
  %v1356 = vpop.permute.xlu0 %1355
  %1357 = vrot.lane.b32.xlu0 %v1221, 32
  %v1358 = vpop.permute.xlu0 %1357
  %1359 = vrot.lane.b32.xlu0 %v1222, 32
  %v1360 = vpop.permute.xlu0 %1359
  %1361 = vrot.lane.b32.xlu0 %v1223, 32
  %v1362 = vpop.permute.xlu0 %1361
  %1363 = vrot.lane.b32.xlu0 %v1224, 32
  %v1364 = vpop.permute.xlu0 %1363
  %1365 = vrot.lane.b32.xlu0 %v1225, 32
  %v1366 = vpop.permute.xlu0 %1365
  %1367 = vrot.lane.b32.xlu0 %v1226, 32
  %v1368 = vpop.permute.xlu0 %1367
  %1369 = vrot.lane.b32.xlu0 %v1227, 32
  %v1370 = vpop.permute.xlu0 %1369
  %1371 = vrot.lane.b32.xlu0 %v1228, 32
  %v1372 = vpop.permute.xlu0 %1371
  %1373 = vrot.lane.b32.xlu0 %v1229, 32
  %v1374 = vpop.permute.xlu0 %1373
  %1375 = vrot.lane.b32.xlu0 %v1230, 32
  %v1376 = vpop.permute.xlu0 %1375
  %1377 = vrot.lane.b32.xlu0 %v1231, 32
  %v1378 = vpop.permute.xlu0 %1377
  %1379 = vrot.lane.b32.xlu0 %v1232, 32
  %v1380 = vpop.permute.xlu0 %1379
  %1381 = vrot.lane.b32.xlu0 %v1233, 32
  %v1382 = vpop.permute.xlu0 %1381
  %1383 = vrot.lane.b32.xlu0 %v1234, 32
  %v1384 = vpop.permute.xlu0 %1383
  %1385 = vrot.lane.b32.xlu0 %v1235, 32
  %v1386 = vpop.permute.xlu0 %1385
  %1387 = vrot.lane.b32.xlu0 %v1236, 32
  %v1388 = vpop.permute.xlu0 %1387
  %1389 = vrot.lane.b32.xlu0 %v1237, 32
  %v1390 = vpop.permute.xlu0 %1389
  %1391 = vrot.lane.b32.xlu0 %v1238, 32
  %v1392 = vpop.permute.xlu0 %1391
  %1393 = vrot.lane.b32.xlu0 %v1239, 32
  %v1394 = vpop.permute.xlu0 %1393
  %1395 = vrot.lane.b32.xlu0 %v1240, 32
  %v1396 = vpop.permute.xlu0 %1395
  %1397 = vrot.lane.b32.xlu0 %v1241, 32
  %v1398 = vpop.permute.xlu0 %1397
  %1399 = vrot.lane.b32.xlu0 %v1242, 32
  %v1400 = vpop.permute.xlu0 %1399
  %1401 = vrot.lane.b32.xlu0 %v1243, 32
  %v1402 = vpop.permute.xlu0 %1401
  %1403 = vrot.lane.b32.xlu0 %v1244, 32
  %v1404 = vpop.permute.xlu0 %1403
  %1405 = vrot.lane.b32.xlu0 %v1245, 32
  %v1406 = vpop.permute.xlu0 %1405
  %1407 = vrot.lane.b32.xlu0 %v1246, 32
  %v1408 = vpop.permute.xlu0 %1407
  %1409 = vrot.lane.b32.xlu0 %v1247, 32
  %v1410 = vpop.permute.xlu0 %1409
  %1411 = vrot.lane.b32.xlu0 %v1248, 32
  %v1412 = vpop.permute.xlu0 %1411
  %1413 = vrot.lane.b32.xlu0 %v1249, 32
  %v1414 = vpop.permute.xlu0 %1413
  %1415 = vrot.lane.b32.xlu0 %v1250, 32
  %v1416 = vpop.permute.xlu0 %1415
  %1417 = vrot.lane.b32.xlu0 %v1251, 32
  %v1418 = vpop.permute.xlu0 %1417
  %1419 = vrot.lane.b32.xlu0 %v1252, 32
  %v1420 = vpop.permute.xlu0 %1419
  %1421 = vrot.lane.b32.xlu0 %v1253, 32
  %v1422 = vpop.permute.xlu0 %1421
  %1423 = vrot.lane.b32.xlu0 %v1254, 32
  %v1424 = vpop.permute.xlu0 %1423
  %1425 = vrot.lane.b32.xlu0 %v1255, 32
  %v1426 = vpop.permute.xlu0 %1425
  %1427 = vrot.lane.b32.xlu0 %v1256, 32
  %v1428 = vpop.permute.xlu0 %1427
  %1429 = vrot.lane.b32.xlu0 %v1257, 32
  %v1430 = vpop.permute.xlu0 %1429
  %1431 = vrot.lane.b32.xlu0 %v1258, 32
  %v1432 = vpop.permute.xlu0 %1431
  %1433 = vrot.lane.b32.xlu0 %v1259, 32
  %v1434 = vpop.permute.xlu0 %1433
  %1435 = vrot.lane.b32.xlu0 %v1260, 32
  %v1436 = vpop.permute.xlu0 %1435
  %1437 = vrot.lane.b32.xlu0 %v1261, 32
  %v1438 = vpop.permute.xlu0 %1437
  %1439 = vrot.lane.b32.xlu0 %v1262, 32
  %v1440 = vpop.permute.xlu0 %1439
  %1441 = vrot.lane.b32.xlu0 %v1263, 32
  %v1442 = vpop.permute.xlu0 %1441
  %1443 = vrot.lane.b32.xlu0 %v1264, 32
  %v1444 = vpop.permute.xlu0 %1443
  %1445 = vrot.lane.b32.xlu0 %v1265, 32
  %v1446 = vpop.permute.xlu0 %1445
  %1447 = vrot.lane.b32.xlu0 %v1266, 32
  %v1448 = vpop.permute.xlu0 %1447
  %1449 = vrot.lane.b32.xlu0 %v1267, 32
  %v1450 = vpop.permute.xlu0 %1449
  %1451 = vrot.lane.b32.xlu0 %v1268, 32
  %v1452 = vpop.permute.xlu0 %1451
  %1453 = vrot.lane.b32.xlu0 %v1269, 32
  %v1454 = vpop.permute.xlu0 %1453
  %1455 = vrot.lane.b32.xlu0 %v1270, 32
  %v1456 = vpop.permute.xlu0 %1455
  %1457 = vrot.lane.b32.xlu0 %v1271, 32
  %v1458 = vpop.permute.xlu0 %1457
  %1459 = vrot.lane.b32.xlu0 %v1272, 32
  %v1460 = vpop.permute.xlu0 %1459
  %1461 = vrot.lane.b32.xlu0 %v1273, 32
  %v1462 = vpop.permute.xlu0 %1461
  %1463 = vrot.lane.b32.xlu0 %v1274, 32
  %v1464 = vpop.permute.xlu0 %1463
  %1465 = vrot.lane.b32.xlu0 %v1275, 32
  %v1466 = vpop.permute.xlu0 %1465
  %1467 = vrot.lane.b32.xlu0 %v1276, 32
  %v1468 = vpop.permute.xlu0 %1467
  %vm1533 = vcmask 331008
  %1534 = vst.msk [vmem:[#allocation2] sm:$0xf] %vm1533, %v1342
  %1535 = vst.msk [vmem:[#allocation2 + $0x4] sm:$0xf] %vm1533, %v1344
  %1536 = vst.msk [vmem:[#allocation2 + $0x8] sm:$0xf] %vm1533, %v1346
  %1537 = vst.msk [vmem:[#allocation2 + $0xc] sm:$0xf] %vm1533, %v1348
  %1538 = vst.msk [vmem:[#allocation2 + $0x10] sm:$0xf] %vm1533, %v1350
  %1539 = vst.msk [vmem:[#allocation2 + $0x14] sm:$0xf] %vm1533, %v1352
  %1540 = vst.msk [vmem:[#allocation2 + $0x18] sm:$0xf] %vm1533, %v1354
  %1541 = vst.msk [vmem:[#allocation2 + $0x1c] sm:$0xf] %vm1533, %v1356
  %1542 = vst.msk [vmem:[#allocation2 + $0x20] sm:$0xf] %vm1533, %v1358
  %1543 = vst.msk [vmem:[#allocation2 + $0x24] sm:$0xf] %vm1533, %v1360
  %1544 = vst.msk [vmem:[#allocation2 + $0x28] sm:$0xf] %vm1533, %v1362
  %1545 = vst.msk [vmem:[#allocation2 + $0x2c] sm:$0xf] %vm1533, %v1364
  %1546 = vst.msk [vmem:[#allocation2 + $0x30] sm:$0xf] %vm1533, %v1366
  %1547 = vst.msk [vmem:[#allocation2 + $0x34] sm:$0xf] %vm1533, %v1368
  %1548 = vst.msk [vmem:[#allocation2 + $0x38] sm:$0xf] %vm1533, %v1370
  %1549 = vst.msk [vmem:[#allocation2 + $0x3c] sm:$0xf] %vm1533, %v1372
  %1550 = vst.msk [vmem:[#allocation2 + $0x40] sm:$0xf] %vm1533, %v1374
  %1551 = vst.msk [vmem:[#allocation2 + $0x44] sm:$0xf] %vm1533, %v1376
  %1552 = vst.msk [vmem:[#allocation2 + $0x48] sm:$0xf] %vm1533, %v1378
  %1553 = vst.msk [vmem:[#allocation2 + $0x4c] sm:$0xf] %vm1533, %v1380
  %1554 = vst.msk [vmem:[#allocation2 + $0x50] sm:$0xf] %vm1533, %v1382
  %1555 = vst.msk [vmem:[#allocation2 + $0x54] sm:$0xf] %vm1533, %v1384
  %1556 = vst.msk [vmem:[#allocation2 + $0x58] sm:$0xf] %vm1533, %v1386
  %1557 = vst.msk [vmem:[#allocation2 + $0x5c] sm:$0xf] %vm1533, %v1388
  %1558 = vst.msk [vmem:[#allocation2 + $0x60] sm:$0xf] %vm1533, %v1390
  %1559 = vst.msk [vmem:[#allocation2 + $0x64] sm:$0xf] %vm1533, %v1392
  %1560 = vst.msk [vmem:[#allocation2 + $0x68] sm:$0xf] %vm1533, %v1394
  %1561 = vst.msk [vmem:[#allocation2 + $0x6c] sm:$0xf] %vm1533, %v1396
  %1562 = vst.msk [vmem:[#allocation2 + $0x70] sm:$0xf] %vm1533, %v1398
  %1563 = vst.msk [vmem:[#allocation2 + $0x74] sm:$0xf] %vm1533, %v1400
  %1564 = vst.msk [vmem:[#allocation2 + $0x78] sm:$0xf] %vm1533, %v1402
  %1565 = vst.msk [vmem:[#allocation2 + $0x7c] sm:$0xf] %vm1533, %v1404
  %1566 = vst.msk [vmem:[#allocation2 + $0x80] sm:$0xf] %vm1533, %v1406
  %1567 = vst.msk [vmem:[#allocation2 + $0x84] sm:$0xf] %vm1533, %v1408
  %1568 = vst.msk [vmem:[#allocation2 + $0x88] sm:$0xf] %vm1533, %v1410
  %1569 = vst.msk [vmem:[#allocation2 + $0x8c] sm:$0xf] %vm1533, %v1412
  %1570 = vst.msk [vmem:[#allocation2 + $0x90] sm:$0xf] %vm1533, %v1414
  %1571 = vst.msk [vmem:[#allocation2 + $0x94] sm:$0xf] %vm1533, %v1416
  %1572 = vst.msk [vmem:[#allocation2 + $0x98] sm:$0xf] %vm1533, %v1418
  %1573 = vst.msk [vmem:[#allocation2 + $0x9c] sm:$0xf] %vm1533, %v1420
  %1574 = vst.msk [vmem:[#allocation2 + $0xa0] sm:$0xf] %vm1533, %v1422
  %1575 = vst.msk [vmem:[#allocation2 + $0xa4] sm:$0xf] %vm1533, %v1424
  %1576 = vst.msk [vmem:[#allocation2 + $0xa8] sm:$0xf] %vm1533, %v1426
  %1577 = vst.msk [vmem:[#allocation2 + $0xac] sm:$0xf] %vm1533, %v1428
  %1578 = vst.msk [vmem:[#allocation2 + $0xb0] sm:$0xf] %vm1533, %v1430
  %1579 = vst.msk [vmem:[#allocation2 + $0xb4] sm:$0xf] %vm1533, %v1432
  %1580 = vst.msk [vmem:[#allocation2 + $0xb8] sm:$0xf] %vm1533, %v1434
  %1581 = vst.msk [vmem:[#allocation2 + $0xbc] sm:$0xf] %vm1533, %v1436
  %1582 = vst.msk [vmem:[#allocation2 + $0xc0] sm:$0xf] %vm1533, %v1438
  %1583 = vst.msk [vmem:[#allocation2 + $0xc4] sm:$0xf] %vm1533, %v1440
  %1584 = vst.msk [vmem:[#allocation2 + $0xc8] sm:$0xf] %vm1533, %v1442
  %1585 = vst.msk [vmem:[#allocation2 + $0xcc] sm:$0xf] %vm1533, %v1444
  %1586 = vst.msk [vmem:[#allocation2 + $0xd0] sm:$0xf] %vm1533, %v1446
  %1587 = vst.msk [vmem:[#allocation2 + $0xd4] sm:$0xf] %vm1533, %v1448
  %1588 = vst.msk [vmem:[#allocation2 + $0xd8] sm:$0xf] %vm1533, %v1450
  %1589 = vst.msk [vmem:[#allocation2 + $0xdc] sm:$0xf] %vm1533, %v1452
  %1590 = vst.msk [vmem:[#allocation2 + $0xe0] sm:$0xf] %vm1533, %v1454
  %1591 = vst.msk [vmem:[#allocation2 + $0xe4] sm:$0xf] %vm1533, %v1456
  %1592 = vst.msk [vmem:[#allocation2 + $0xe8] sm:$0xf] %vm1533, %v1458
  %1593 = vst.msk [vmem:[#allocation2 + $0xec] sm:$0xf] %vm1533, %v1460
  %1594 = vst.msk [vmem:[#allocation2 + $0xf0] sm:$0xf] %vm1533, %v1462
  %1595 = vst.msk [vmem:[#allocation2 + $0xf4] sm:$0xf] %vm1533, %v1464
  %1596 = vst.msk [vmem:[#allocation2 + $0xf8] sm:$0xf] %vm1533, %v1466
  %1597 = vst.msk [vmem:[#allocation2 + $0xfc] sm:$0xf] %vm1533, %v1468
  %v1598 = vld [vmem:[#allocation2] sm:$0xf]
  %v1599 = vld [vmem:[#allocation2 + $0x4] sm:$0xf]
  %v1600 = vld [vmem:[#allocation2 + $0x8] sm:$0xf]
  %v1601 = vld [vmem:[#allocation2 + $0xc] sm:$0xf]
  %v1602 = vld [vmem:[#allocation2 + $0x10] sm:$0xf]
  %v1603 = vld [vmem:[#allocation2 + $0x14] sm:$0xf]
  %v1604 = vld [vmem:[#allocation2 + $0x18] sm:$0xf]
  %v1605 = vld [vmem:[#allocation2 + $0x1c] sm:$0xf]
  %v1606 = vld [vmem:[#allocation2 + $0x20] sm:$0xf]
  %v1607 = vld [vmem:[#allocation2 + $0x24] sm:$0xf]
  %v1608 = vld [vmem:[#allocation2 + $0x28] sm:$0xf]
  %v1609 = vld [vmem:[#allocation2 + $0x2c] sm:$0xf]
  %v1610 = vld [vmem:[#allocation2 + $0x30] sm:$0xf]
  %v1611 = vld [vmem:[#allocation2 + $0x34] sm:$0xf]
  %v1612 = vld [vmem:[#allocation2 + $0x38] sm:$0xf]
  %v1613 = vld [vmem:[#allocation2 + $0x3c] sm:$0xf]
  %v1614 = vld [vmem:[#allocation2 + $0x40] sm:$0xf]
  %v1615 = vld [vmem:[#allocation2 + $0x44] sm:$0xf]
  %v1616 = vld [vmem:[#allocation2 + $0x48] sm:$0xf]
  %v1617 = vld [vmem:[#allocation2 + $0x4c] sm:$0xf]
  %v1618 = vld [vmem:[#allocation2 + $0x50] sm:$0xf]
  %v1619 = vld [vmem:[#allocation2 + $0x54] sm:$0xf]
  %v1620 = vld [vmem:[#allocation2 + $0x58] sm:$0xf]
  %v1621 = vld [vmem:[#allocation2 + $0x5c] sm:$0xf]
  %v1622 = vld [vmem:[#allocation2 + $0x60] sm:$0xf]
  %v1623 = vld [vmem:[#allocation2 + $0x64] sm:$0xf]
  %v1624 = vld [vmem:[#allocation2 + $0x68] sm:$0xf]
  %v1625 = vld [vmem:[#allocation2 + $0x6c] sm:$0xf]
  %v1626 = vld [vmem:[#allocation2 + $0x70] sm:$0xf]
  %v1627 = vld [vmem:[#allocation2 + $0x74] sm:$0xf]
  %v1628 = vld [vmem:[#allocation2 + $0x78] sm:$0xf]
  %v1629 = vld [vmem:[#allocation2 + $0x7c] sm:$0xf]
  %v1630 = vld [vmem:[#allocation2 + $0x80] sm:$0xf]
  %v1631 = vld [vmem:[#allocation2 + $0x84] sm:$0xf]
  %v1632 = vld [vmem:[#allocation2 + $0x88] sm:$0xf]
  %v1633 = vld [vmem:[#allocation2 + $0x8c] sm:$0xf]
  %v1634 = vld [vmem:[#allocation2 + $0x90] sm:$0xf]
  %v1635 = vld [vmem:[#allocation2 + $0x94] sm:$0xf]
  %v1636 = vld [vmem:[#allocation2 + $0x98] sm:$0xf]
  %v1637 = vld [vmem:[#allocation2 + $0x9c] sm:$0xf]
  %v1638 = vld [vmem:[#allocation2 + $0xa0] sm:$0xf]
  %v1639 = vld [vmem:[#allocation2 + $0xa4] sm:$0xf]
  %v1640 = vld [vmem:[#allocation2 + $0xa8] sm:$0xf]
  %v1641 = vld [vmem:[#allocation2 + $0xac] sm:$0xf]
  %v1642 = vld [vmem:[#allocation2 + $0xb0] sm:$0xf]
  %v1643 = vld [vmem:[#allocation2 + $0xb4] sm:$0xf]
  %v1644 = vld [vmem:[#allocation2 + $0xb8] sm:$0xf]
  %v1645 = vld [vmem:[#allocation2 + $0xbc] sm:$0xf]
  %v1646 = vld [vmem:[#allocation2 + $0xc0] sm:$0xf]
  %v1647 = vld [vmem:[#allocation2 + $0xc4] sm:$0xf]
  %v1648 = vld [vmem:[#allocation2 + $0xc8] sm:$0xf]
  %v1649 = vld [vmem:[#allocation2 + $0xcc] sm:$0xf]
  %v1650 = vld [vmem:[#allocation2 + $0xd0] sm:$0xf]
  %v1651 = vld [vmem:[#allocation2 + $0xd4] sm:$0xf]
  %v1652 = vld [vmem:[#allocation2 + $0xd8] sm:$0xf]
  %v1653 = vld [vmem:[#allocation2 + $0xdc] sm:$0xf]
  %v1654 = vld [vmem:[#allocation2 + $0xe0] sm:$0xf]
  %v1655 = vld [vmem:[#allocation2 + $0xe4] sm:$0xf]
  %v1656 = vld [vmem:[#allocation2 + $0xe8] sm:$0xf]
  %v1657 = vld [vmem:[#allocation2 + $0xec] sm:$0xf]
  %v1658 = vld [vmem:[#allocation2 + $0xf0] sm:$0xf]
  %v1659 = vld [vmem:[#allocation2 + $0xf4] sm:$0xf]
  %v1660 = vld [vmem:[#allocation2 + $0xf8] sm:$0xf]
  %v1661 = vld [vmem:[#allocation2 + $0xfc] sm:$0xf]
  %v1662 = vld [vmem:[%s4] sm:$0xf]
  %v1663 = vld [vmem:[%s4 + $0x4] sm:$0xf]
  %v1664 = vld [vmem:[%s4 + $0x8] sm:$0xf]
  %v1665 = vld [vmem:[%s4 + $0xc] sm:$0xf]
  %v1666 = vld [vmem:[%s4 + $0x10] sm:$0xf]
  %v1667 = vld [vmem:[%s4 + $0x14] sm:$0x1]
  %v1668 = vld [vmem:[%s5] sm:$0x1]
  %v1670 = vperm.slane %v1668, 0
  %v1736 = vunpack.c.l.b16 %v1598
  %v1737 = vunpack.c.l.b16 %v1599
  %v1738 = vunpack.c.l.b16 %v1600
  %v1739 = vunpack.c.l.b16 %v1601
  %v1740 = vunpack.c.l.b16 %v1602
  %v1741 = vunpack.c.l.b16 %v1603
  %v1742 = vunpack.c.l.b16 %v1604
  %v1743 = vunpack.c.l.b16 %v1605
  %v1744 = vunpack.c.l.b16 %v1606
  %v1745 = vunpack.c.l.b16 %v1607
  %v1746 = vunpack.c.l.b16 %v1608
  %v1747 = vunpack.c.l.b16 %v1609
  %v1748 = vunpack.c.l.b16 %v1610
  %v1749 = vunpack.c.l.b16 %v1611
  %v1750 = vunpack.c.l.b16 %v1612
  %v1751 = vunpack.c.l.b16 %v1613
  %v1752 = vunpack.c.l.b16 %v1614
  %v1753 = vunpack.c.l.b16 %v1615
  %v1754 = vunpack.c.l.b16 %v1616
  %v1755 = vunpack.c.l.b16 %v1617
  %v1756 = vunpack.c.l.b16 %v1618
  %v1757 = vunpack.c.l.b16 %v1619
  %v1758 = vunpack.c.l.b16 %v1620
  %v1759 = vunpack.c.l.b16 %v1621
  %v1760 = vunpack.c.l.b16 %v1622
  %v1761 = vunpack.c.l.b16 %v1623
  %v1762 = vunpack.c.l.b16 %v1624
  %v1763 = vunpack.c.l.b16 %v1625
  %v1764 = vunpack.c.l.b16 %v1626
  %v1765 = vunpack.c.l.b16 %v1627
  %v1766 = vunpack.c.l.b16 %v1628
  %v1767 = vunpack.c.l.b16 %v1629
  %v1768 = vunpack.c.l.b16 %v1630
  %v1769 = vunpack.c.l.b16 %v1631
  %v1770 = vunpack.c.l.b16 %v1632
  %v1771 = vunpack.c.l.b16 %v1633
  %v1772 = vunpack.c.l.b16 %v1634
  %v1773 = vunpack.c.l.b16 %v1635
  %v1774 = vunpack.c.l.b16 %v1636
  %v1775 = vunpack.c.l.b16 %v1637
  %v1776 = vunpack.c.l.b16 %v1638
  %v1777 = vunpack.c.l.b16 %v1639
  %v1778 = vunpack.c.l.b16 %v1640
  %v1779 = vunpack.c.l.b16 %v1641
  %v1780 = vunpack.c.l.b16 %v1642
  %v1781 = vunpack.c.l.b16 %v1643
  %v1782 = vunpack.c.l.b16 %v1644
  %v1783 = vunpack.c.l.b16 %v1645
  %v1784 = vunpack.c.l.b16 %v1646
  %v1785 = vunpack.c.l.b16 %v1647
  %v1786 = vunpack.c.l.b16 %v1648
  %v1787 = vunpack.c.l.b16 %v1649
  %v1788 = vunpack.c.l.b16 %v1650
  %v1789 = vunpack.c.l.b16 %v1651
  %v1790 = vunpack.c.l.b16 %v1652
  %v1791 = vunpack.c.l.b16 %v1653
  %v1792 = vunpack.c.l.b16 %v1654
  %v1793 = vunpack.c.l.b16 %v1655
  %v1794 = vunpack.c.l.b16 %v1656
  %v1795 = vunpack.c.l.b16 %v1657
  %v1796 = vunpack.c.l.b16 %v1658
  %v1797 = vunpack.c.l.b16 %v1659
  %v1798 = vunpack.c.l.b16 %v1660
  %v1799 = vunpack.c.l.b16 %v1661
  %v1800 = vpack.c.b16 %v1737, %v1736
  %v1801 = vpack.c.b16 %v1739, %v1738
  %v1802 = vpack.c.b16 %v1741, %v1740
  %v1803 = vpack.c.b16 %v1743, %v1742
  %v1804 = vpack.c.b16 %v1745, %v1744
  %v1805 = vpack.c.b16 %v1747, %v1746
  %v1806 = vpack.c.b16 %v1749, %v1748
  %v1807 = vpack.c.b16 %v1751, %v1750
  %v1808 = vpack.c.b16 %v1753, %v1752
  %v1809 = vpack.c.b16 %v1755, %v1754
  %v1810 = vpack.c.b16 %v1757, %v1756
  %v1811 = vpack.c.b16 %v1759, %v1758
  %v1812 = vpack.c.b16 %v1761, %v1760
  %v1813 = vpack.c.b16 %v1763, %v1762
  %v1814 = vpack.c.b16 %v1765, %v1764
  %v1815 = vpack.c.b16 %v1767, %v1766
  %v1816 = vpack.c.b16 %v1769, %v1768
  %v1817 = vpack.c.b16 %v1771, %v1770
  %v1818 = vpack.c.b16 %v1773, %v1772
  %v1819 = vpack.c.b16 %v1775, %v1774
  %v1820 = vpack.c.b16 %v1777, %v1776
  %v1821 = vpack.c.b16 %v1779, %v1778
  %v1822 = vpack.c.b16 %v1781, %v1780
  %v1823 = vpack.c.b16 %v1783, %v1782
  %v1824 = vpack.c.b16 %v1785, %v1784
  %v1825 = vpack.c.b16 %v1787, %v1786
  %v1826 = vpack.c.b16 %v1789, %v1788
  %v1827 = vpack.c.b16 %v1791, %v1790
  %v1828 = vpack.c.b16 %v1793, %v1792
  %v1829 = vpack.c.b16 %v1795, %v1794
  %v1830 = vpack.c.b16 %v1797, %v1796
  %v1831 = vpack.c.b16 %v1799, %v1798
  %v1838 = vunpack.c.l.b16 %v1662
  %v1839 = vunpack.c.l.b16 %v1663
  %v1840 = vunpack.c.l.b16 %v1664
  %v1841 = vunpack.c.l.b16 %v1665
  %v1842 = vunpack.c.l.b16 %v1666
  %v1843 = vunpack.c.l.b16 %v1667
  %v1844 = vpack.c.b16 %v1839, %v1838
  %v1845 = vpack.c.b16 %v1841, %v1840
  %v1846 = vpack.c.b16 %v1843, %v1842
  %vm1849 = vcmask 334848
  %v1851 = vsel %vm1849, %v1800, 0
  %v1854 = vsel %vm1849, %v1801, 0
  %v1857 = vsel %vm1849, %v1802, 0
  %v1860 = vsel %vm1849, %v1803, 0
  %v1863 = vsel %vm1849, %v1804, 0
  %v1866 = vsel %vm1849, %v1805, 0
  %v1869 = vsel %vm1849, %v1806, 0
  %v1872 = vsel %vm1849, %v1807, 0
  %v1875 = vsel %vm1849, %v1808, 0
  %v1878 = vsel %vm1849, %v1809, 0
  %v1881 = vsel %vm1849, %v1810, 0
  %v1884 = vsel %vm1849, %v1811, 0
  %v1887 = vsel %vm1849, %v1812, 0
  %v1890 = vsel %vm1849, %v1813, 0
  %v1893 = vsel %vm1849, %v1814, 0
  %v1896 = vsel %vm1849, %v1815, 0
  %v1899 = vsel %vm1849, %v1816, 0
  %v1902 = vsel %vm1849, %v1817, 0
  %v1905 = vsel %vm1849, %v1818, 0
  %v1908 = vsel %vm1849, %v1819, 0
  %v1911 = vsel %vm1849, %v1820, 0
  %v1914 = vsel %vm1849, %v1821, 0
  %v1917 = vsel %vm1849, %v1822, 0
  %v1920 = vsel %vm1849, %v1823, 0
  %v1923 = vsel %vm1849, %v1824, 0
  %v1926 = vsel %vm1849, %v1825, 0
  %v1929 = vsel %vm1849, %v1826, 0
  %v1932 = vsel %vm1849, %v1827, 0
  %v1935 = vsel %vm1849, %v1828, 0
  %v1938 = vsel %vm1849, %v1829, 0
  %v1941 = vsel %vm1849, %v1830, 0
  %v1944 = vsel %vm1849, %v1831, 0
  %vm1946 = vcmask 1043456
  %vm1947 = vcmask 1044480
  %v1948 = vsel %vm1946, 4294967295, 65535
  %v1949 = vsel %vm1947, %v1948, 0
  %v1951 = vand.u32 %v1846, %v1949
  %1953 = vmatpush.bf16.msra.mxu0 0
  %1954 = vmatpush.bf16.msra.mxu0 0
  %1955 = vmatpush.bf16.msra.mxu0 0
  %1956 = vmatpush.bf16.msra.mxu0 0
  %1957 = vmatpush.bf16.msra.mxu0 0
  %1958 = vmatpush.bf16.msra.mxu0 %v1951
  %1959 = vmatpush.bf16.msra.mxu0 %v1845
  %1960 = vmatpush.bf16.msra.mxu0 %v1844
  %1961 = vmatmul.bf16.gmra.mxu0 %v1851
  %v1962 = vpop.f32.mrf.mxu0
  %v1963 = vadd.f32 %v1670, %v1962
  %v1964 = vpop.f32.mrf.mxu0
  %v1965 = vadd.f32 %v1670, %v1964
  %1966 = vmatmul.bf16.gmra.mxu0 %v1854
  %v1967 = vpop.f32.mrf.mxu0
  %v1968 = vadd.f32 %v1670, %v1967
  %v1969 = vpop.f32.mrf.mxu0
  %v1970 = vadd.f32 %v1670, %v1969
  %1971 = vmatmul.bf16.gmra.mxu0 %v1857
  %v1972 = vpop.f32.mrf.mxu0
  %v1973 = vadd.f32 %v1670, %v1972
  %v1974 = vpop.f32.mrf.mxu0
  %v1975 = vadd.f32 %v1670, %v1974
  %1976 = vmatmul.bf16.gmra.mxu0 %v1860
  %v1977 = vpop.f32.mrf.mxu0
  %v1978 = vadd.f32 %v1670, %v1977
  %v1979 = vpop.f32.mrf.mxu0
  %v1980 = vadd.f32 %v1670, %v1979
  %1981 = vmatmul.bf16.gmra.mxu0 %v1863
  %v1982 = vpop.f32.mrf.mxu0
  %v1983 = vadd.f32 %v1670, %v1982
  %v1984 = vpop.f32.mrf.mxu0
  %v1985 = vadd.f32 %v1670, %v1984
  %1986 = vmatmul.bf16.gmra.mxu0 %v1866
  %v1987 = vpop.f32.mrf.mxu0
  %v1988 = vadd.f32 %v1670, %v1987
  %v1989 = vpop.f32.mrf.mxu0
  %v1990 = vadd.f32 %v1670, %v1989
  %1991 = vmatmul.bf16.gmra.mxu0 %v1869
  %v1992 = vpop.f32.mrf.mxu0
  %v1993 = vadd.f32 %v1670, %v1992
  %v1994 = vpop.f32.mrf.mxu0
  %v1995 = vadd.f32 %v1670, %v1994
  %1996 = vmatmul.bf16.gmra.mxu0 %v1872
  %v1997 = vpop.f32.mrf.mxu0
  %v1998 = vadd.f32 %v1670, %v1997
  %v1999 = vpop.f32.mrf.mxu0
  %v2000 = vadd.f32 %v1670, %v1999
  %2001 = vmatmul.bf16.gmra.mxu0 %v1875
  %v2002 = vpop.f32.mrf.mxu0
  %v2003 = vadd.f32 %v1670, %v2002
  %v2004 = vpop.f32.mrf.mxu0
  %v2005 = vadd.f32 %v1670, %v2004
  %2006 = vmatmul.bf16.gmra.mxu0 %v1878
  %v2007 = vpop.f32.mrf.mxu0
  %v2008 = vadd.f32 %v1670, %v2007
  %v2009 = vpop.f32.mrf.mxu0
  %v2010 = vadd.f32 %v1670, %v2009
  %2011 = vmatmul.bf16.gmra.mxu0 %v1881
  %v2012 = vpop.f32.mrf.mxu0
  %v2013 = vadd.f32 %v1670, %v2012
  %v2014 = vpop.f32.mrf.mxu0
  %v2015 = vadd.f32 %v1670, %v2014
  %2016 = vmatmul.bf16.gmra.mxu0 %v1884
  %v2017 = vpop.f32.mrf.mxu0
  %v2018 = vadd.f32 %v1670, %v2017
  %v2019 = vpop.f32.mrf.mxu0
  %v2020 = vadd.f32 %v1670, %v2019
  %2021 = vmatmul.bf16.gmra.mxu0 %v1887
  %v2022 = vpop.f32.mrf.mxu0
  %v2023 = vadd.f32 %v1670, %v2022
  %v2024 = vpop.f32.mrf.mxu0
  %v2025 = vadd.f32 %v1670, %v2024
  %2026 = vmatmul.bf16.gmra.mxu0 %v1890
  %v2027 = vpop.f32.mrf.mxu0
  %v2028 = vadd.f32 %v1670, %v2027
  %v2029 = vpop.f32.mrf.mxu0
  %v2030 = vadd.f32 %v1670, %v2029
  %2031 = vmatmul.bf16.gmra.mxu0 %v1893
  %v2032 = vpop.f32.mrf.mxu0
  %v2033 = vadd.f32 %v1670, %v2032
  %v2034 = vpop.f32.mrf.mxu0
  %v2035 = vadd.f32 %v1670, %v2034
  %2036 = vmatmul.bf16.gmra.mxu0 %v1896
  %v2037 = vpop.f32.mrf.mxu0
  %v2038 = vadd.f32 %v1670, %v2037
  %v2039 = vpop.f32.mrf.mxu0
  %v2040 = vadd.f32 %v1670, %v2039
  %2041 = vmatmul.bf16.gmra.mxu0 %v1899
  %v2042 = vpop.f32.mrf.mxu0
  %v2043 = vadd.f32 %v1670, %v2042
  %v2044 = vpop.f32.mrf.mxu0
  %v2045 = vadd.f32 %v1670, %v2044
  %2046 = vmatmul.bf16.gmra.mxu0 %v1902
  %v2047 = vpop.f32.mrf.mxu0
  %v2048 = vadd.f32 %v1670, %v2047
  %v2049 = vpop.f32.mrf.mxu0
  %v2050 = vadd.f32 %v1670, %v2049
  %2051 = vmatmul.bf16.gmra.mxu0 %v1905
  %v2052 = vpop.f32.mrf.mxu0
  %v2053 = vadd.f32 %v1670, %v2052
  %v2054 = vpop.f32.mrf.mxu0
  %v2055 = vadd.f32 %v1670, %v2054
  %2056 = vmatmul.bf16.gmra.mxu0 %v1908
  %v2057 = vpop.f32.mrf.mxu0
  %v2058 = vadd.f32 %v1670, %v2057
  %v2059 = vpop.f32.mrf.mxu0
  %v2060 = vadd.f32 %v1670, %v2059
  %2061 = vmatmul.bf16.gmra.mxu0 %v1911
  %v2062 = vpop.f32.mrf.mxu0
  %v2063 = vadd.f32 %v1670, %v2062
  %v2064 = vpop.f32.mrf.mxu0
  %v2065 = vadd.f32 %v1670, %v2064
  %2066 = vmatmul.bf16.gmra.mxu0 %v1914
  %v2067 = vpop.f32.mrf.mxu0
  %v2068 = vadd.f32 %v1670, %v2067
  %v2069 = vpop.f32.mrf.mxu0
  %v2070 = vadd.f32 %v1670, %v2069
  %2071 = vmatmul.bf16.gmra.mxu0 %v1917
  %v2072 = vpop.f32.mrf.mxu0
  %v2073 = vadd.f32 %v1670, %v2072
  %v2074 = vpop.f32.mrf.mxu0
  %v2075 = vadd.f32 %v1670, %v2074
  %2076 = vmatmul.bf16.gmra.mxu0 %v1920
  %v2077 = vpop.f32.mrf.mxu0
  %v2078 = vadd.f32 %v1670, %v2077
  %v2079 = vpop.f32.mrf.mxu0
  %v2080 = vadd.f32 %v1670, %v2079
  %2081 = vmatmul.bf16.gmra.mxu0 %v1923
  %v2082 = vpop.f32.mrf.mxu0
  %v2083 = vadd.f32 %v1670, %v2082
  %v2084 = vpop.f32.mrf.mxu0
  %v2085 = vadd.f32 %v1670, %v2084
  %2086 = vmatmul.bf16.gmra.mxu0 %v1926
  %v2087 = vpop.f32.mrf.mxu0
  %v2088 = vadd.f32 %v1670, %v2087
  %v2089 = vpop.f32.mrf.mxu0
  %v2090 = vadd.f32 %v1670, %v2089
  %2091 = vmatmul.bf16.gmra.mxu0 %v1929
  %v2092 = vpop.f32.mrf.mxu0
  %v2093 = vadd.f32 %v1670, %v2092
  %v2094 = vpop.f32.mrf.mxu0
  %v2095 = vadd.f32 %v1670, %v2094
  %2096 = vmatmul.bf16.gmra.mxu0 %v1932
  %v2097 = vpop.f32.mrf.mxu0
  %v2098 = vadd.f32 %v1670, %v2097
  %v2099 = vpop.f32.mrf.mxu0
  %v2100 = vadd.f32 %v1670, %v2099
  %2101 = vmatmul.bf16.gmra.mxu0 %v1935
  %v2102 = vpop.f32.mrf.mxu0
  %v2103 = vadd.f32 %v1670, %v2102
  %v2104 = vpop.f32.mrf.mxu0
  %v2105 = vadd.f32 %v1670, %v2104
  %2106 = vmatmul.bf16.gmra.mxu0 %v1938
  %v2107 = vpop.f32.mrf.mxu0
  %v2108 = vadd.f32 %v1670, %v2107
  %v2109 = vpop.f32.mrf.mxu0
  %v2110 = vadd.f32 %v1670, %v2109
  %2111 = vmatmul.bf16.gmra.mxu0 %v1941
  %v2112 = vpop.f32.mrf.mxu0
  %v2113 = vadd.f32 %v1670, %v2112
  %v2114 = vpop.f32.mrf.mxu0
  %v2115 = vadd.f32 %v1670, %v2114
  %2116 = vmatmul.bf16.gmra.mxu0 %v1944
  %v2117 = vpop.f32.mrf.mxu0
  %v2118 = vadd.f32 %v1670, %v2117
  %v2119 = vpop.f32.mrf.mxu0
  %v2120 = vadd.f32 %v1670, %v2119
  %2121 = vdwg.mxu0
  %v2122 = vmax.f32 %v1963, 0.0
  %v2123 = vmax.f32 %v1965, 0.0
  %v2124 = vmax.f32 %v1968, 0.0
  %v2125 = vmax.f32 %v1970, 0.0
  %v2126 = vmax.f32 %v1973, 0.0
  %v2127 = vmax.f32 %v1975, 0.0
  %v2128 = vmax.f32 %v1978, 0.0
  %v2129 = vmax.f32 %v1980, 0.0
  %v2130 = vmax.f32 %v1983, 0.0
  %v2131 = vmax.f32 %v1985, 0.0
  %v2132 = vmax.f32 %v1988, 0.0
  %v2133 = vmax.f32 %v1990, 0.0
  %v2134 = vmax.f32 %v1993, 0.0
  %v2135 = vmax.f32 %v1995, 0.0
  %v2136 = vmax.f32 %v1998, 0.0
  %v2137 = vmax.f32 %v2000, 0.0
  %v2138 = vmax.f32 %v2003, 0.0
  %v2139 = vmax.f32 %v2005, 0.0
  %v2140 = vmax.f32 %v2008, 0.0
  %v2141 = vmax.f32 %v2010, 0.0
  %v2142 = vmax.f32 %v2013, 0.0
  %v2143 = vmax.f32 %v2015, 0.0
  %v2144 = vmax.f32 %v2018, 0.0
  %v2145 = vmax.f32 %v2020, 0.0
  %v2146 = vmax.f32 %v2023, 0.0
  %v2147 = vmax.f32 %v2025, 0.0
  %v2148 = vmax.f32 %v2028, 0.0
  %v2149 = vmax.f32 %v2030, 0.0
  %v2150 = vmax.f32 %v2033, 0.0
  %v2151 = vmax.f32 %v2035, 0.0
  %v2152 = vmax.f32 %v2038, 0.0
  %v2153 = vmax.f32 %v2040, 0.0
  %v2154 = vmax.f32 %v2043, 0.0
  %v2155 = vmax.f32 %v2045, 0.0
  %v2156 = vmax.f32 %v2048, 0.0
  %v2157 = vmax.f32 %v2050, 0.0
  %v2158 = vmax.f32 %v2053, 0.0
  %v2159 = vmax.f32 %v2055, 0.0
  %v2160 = vmax.f32 %v2058, 0.0
  %v2161 = vmax.f32 %v2060, 0.0
  %v2162 = vmax.f32 %v2063, 0.0
  %v2163 = vmax.f32 %v2065, 0.0
  %v2164 = vmax.f32 %v2068, 0.0
  %v2165 = vmax.f32 %v2070, 0.0
  %v2166 = vmax.f32 %v2073, 0.0
  %v2167 = vmax.f32 %v2075, 0.0
  %v2168 = vmax.f32 %v2078, 0.0
  %v2169 = vmax.f32 %v2080, 0.0
  %v2170 = vmax.f32 %v2083, 0.0
  %v2171 = vmax.f32 %v2085, 0.0
  %v2172 = vmax.f32 %v2088, 0.0
  %v2173 = vmax.f32 %v2090, 0.0
  %v2174 = vmax.f32 %v2093, 0.0
  %v2175 = vmax.f32 %v2095, 0.0
  %v2176 = vmax.f32 %v2098, 0.0
  %v2177 = vmax.f32 %v2100, 0.0
  %v2178 = vmax.f32 %v2103, 0.0
  %v2179 = vmax.f32 %v2105, 0.0
  %v2180 = vmax.f32 %v2108, 0.0
  %v2181 = vmax.f32 %v2110, 0.0
  %v2182 = vmax.f32 %v2113, 0.0
  %v2183 = vmax.f32 %v2115, 0.0
  %v2184 = vmax.f32 %v2118, 0.0
  %v2185 = vmax.f32 %v2120, 0.0
  %v2186 = vpack.c.bf16 %v2123, %v2122
  %v2187 = vpack.c.bf16 %v2125, %v2124
  %v2188 = vpack.c.bf16 %v2127, %v2126
  %v2189 = vpack.c.bf16 %v2129, %v2128
  %v2190 = vpack.c.bf16 %v2131, %v2130
  %v2191 = vpack.c.bf16 %v2133, %v2132
  %v2192 = vpack.c.bf16 %v2135, %v2134
  %v2193 = vpack.c.bf16 %v2137, %v2136
  %v2194 = vpack.c.bf16 %v2139, %v2138
  %v2195 = vpack.c.bf16 %v2141, %v2140
  %v2196 = vpack.c.bf16 %v2143, %v2142
  %v2197 = vpack.c.bf16 %v2145, %v2144
  %v2198 = vpack.c.bf16 %v2147, %v2146
  %v2199 = vpack.c.bf16 %v2149, %v2148
  %v2200 = vpack.c.bf16 %v2151, %v2150
  %v2201 = vpack.c.bf16 %v2153, %v2152
  %v2202 = vpack.c.bf16 %v2155, %v2154
  %v2203 = vpack.c.bf16 %v2157, %v2156
  %v2204 = vpack.c.bf16 %v2159, %v2158
  %v2205 = vpack.c.bf16 %v2161, %v2160
  %v2206 = vpack.c.bf16 %v2163, %v2162
  %v2207 = vpack.c.bf16 %v2165, %v2164
  %v2208 = vpack.c.bf16 %v2167, %v2166
  %v2209 = vpack.c.bf16 %v2169, %v2168
  %v2210 = vpack.c.bf16 %v2171, %v2170
  %v2211 = vpack.c.bf16 %v2173, %v2172
  %v2212 = vpack.c.bf16 %v2175, %v2174
  %v2213 = vpack.c.bf16 %v2177, %v2176
  %v2214 = vpack.c.bf16 %v2179, %v2178
  %v2215 = vpack.c.bf16 %v2181, %v2180
  %v2216 = vpack.c.bf16 %v2183, %v2182
  %v2217 = vpack.c.bf16 %v2185, %v2184
  %v2218 = vld [vmem:[%s6] sm:$0xf]
  %v2219 = vld [vmem:[%s6 + $0x4] sm:$0xf]
  %v2220 = vld [vmem:[%s6 + $0x8] sm:$0xf]
  %v2221 = vld [vmem:[%s6 + $0xc] sm:$0xf]
  %v2222 = vld [vmem:[%s6 + $0x10] sm:$0xf]
  %v2223 = vld [vmem:[%s6 + $0x14] sm:$0xf]
  %v2224 = vld [vmem:[%s6 + $0x18] sm:$0xf]
  %v2225 = vld [vmem:[%s6 + $0x1c] sm:$0xf]
  %v2226 = vld [vmem:[%s7] sm:$0x1]
  %v2228 = vperm.slane %v2226, 0
  %v2238 = vunpack.c.l.b16 %v2218
  %v2239 = vunpack.c.l.b16 %v2219
  %v2240 = vunpack.c.l.b16 %v2220
  %v2241 = vunpack.c.l.b16 %v2221
  %v2242 = vunpack.c.l.b16 %v2222
  %v2243 = vunpack.c.l.b16 %v2223
  %v2244 = vunpack.c.l.b16 %v2224
  %v2245 = vunpack.c.l.b16 %v2225
  %v2246 = vpack.c.b16 %v2239, %v2238
  %v2247 = vpack.c.b16 %v2241, %v2240
  %v2248 = vpack.c.b16 %v2243, %v2242
  %v2249 = vpack.c.b16 %v2245, %v2244
  %vm2254 = vcmask 523264
  %v2256 = vsel %vm2254, %v2186, 0
  %v2259 = vsel %vm2254, %v2187, 0
  %v2262 = vsel %vm2254, %v2188, 0
  %v2265 = vsel %vm2254, %v2189, 0
  %v2268 = vsel %vm2254, %v2190, 0
  %v2271 = vsel %vm2254, %v2191, 0
  %v2274 = vsel %vm2254, %v2192, 0
  %v2277 = vsel %vm2254, %v2193, 0
  %v2280 = vsel %vm2254, %v2194, 0
  %v2283 = vsel %vm2254, %v2195, 0
  %v2286 = vsel %vm2254, %v2196, 0
  %v2289 = vsel %vm2254, %v2197, 0
  %v2292 = vsel %vm2254, %v2198, 0
  %v2295 = vsel %vm2254, %v2199, 0
  %v2298 = vsel %vm2254, %v2200, 0
  %v2301 = vsel %vm2254, %v2201, 0
  %v2304 = vsel %vm2254, %v2202, 0
  %v2307 = vsel %vm2254, %v2203, 0
  %v2310 = vsel %vm2254, %v2204, 0
  %v2313 = vsel %vm2254, %v2205, 0
  %v2316 = vsel %vm2254, %v2206, 0
  %v2319 = vsel %vm2254, %v2207, 0
  %v2322 = vsel %vm2254, %v2208, 0
  %v2325 = vsel %vm2254, %v2209, 0
  %v2328 = vsel %vm2254, %v2210, 0
  %v2331 = vsel %vm2254, %v2211, 0
  %v2334 = vsel %vm2254, %v2212, 0
  %v2337 = vsel %vm2254, %v2213, 0
  %v2340 = vsel %vm2254, %v2214, 0
  %v2343 = vsel %vm2254, %v2215, 0
  %v2346 = vsel %vm2254, %v2216, 0
  %v2349 = vsel %vm2254, %v2217, 0
  %2351 = vmatpush.bf16.msra.mxu0 0
  %2352 = vmatpush.bf16.msra.mxu0 0
  %2353 = vmatpush.bf16.msra.mxu0 0
  %2354 = vmatpush.bf16.msra.mxu0 0
  %2355 = vmatpush.bf16.msra.mxu0 %v2249
  %2356 = vmatpush.bf16.msra.mxu0 %v2248
  %2357 = vmatpush.bf16.msra.mxu0 %v2247
  %2358 = vmatpush.bf16.msra.mxu0 %v2246
  %2359 = vmatmul.bf16.gmra.mxu0 %v2256
  %v2360 = vpop.f32.mrf.mxu0
  %v2361 = vadd.f32 %v2228, %v2360
  %v2362 = vpop.f32.mrf.mxu0
  %v2363 = vadd.f32 %v2228, %v2362
  %2364 = vmatmul.bf16.gmra.mxu0 %v2259
  %v2365 = vpop.f32.mrf.mxu0
  %v2366 = vadd.f32 %v2228, %v2365
  %v2367 = vpop.f32.mrf.mxu0
  %v2368 = vadd.f32 %v2228, %v2367
  %2369 = vmatmul.bf16.gmra.mxu0 %v2262
  %v2370 = vpop.f32.mrf.mxu0
  %v2371 = vadd.f32 %v2228, %v2370
  %v2372 = vpop.f32.mrf.mxu0
  %v2373 = vadd.f32 %v2228, %v2372
  %2374 = vmatmul.bf16.gmra.mxu0 %v2265
  %v2375 = vpop.f32.mrf.mxu0
  %v2376 = vadd.f32 %v2228, %v2375
  %v2377 = vpop.f32.mrf.mxu0
  %v2378 = vadd.f32 %v2228, %v2377
  %2379 = vmatmul.bf16.gmra.mxu0 %v2268
  %v2380 = vpop.f32.mrf.mxu0
  %v2381 = vadd.f32 %v2228, %v2380
  %v2382 = vpop.f32.mrf.mxu0
  %v2383 = vadd.f32 %v2228, %v2382
  %2384 = vmatmul.bf16.gmra.mxu0 %v2271
  %v2385 = vpop.f32.mrf.mxu0
  %v2386 = vadd.f32 %v2228, %v2385
  %v2387 = vpop.f32.mrf.mxu0
  %v2388 = vadd.f32 %v2228, %v2387
  %2389 = vmatmul.bf16.gmra.mxu0 %v2274
  %v2390 = vpop.f32.mrf.mxu0
  %v2391 = vadd.f32 %v2228, %v2390
  %v2392 = vpop.f32.mrf.mxu0
  %v2393 = vadd.f32 %v2228, %v2392
  %2394 = vmatmul.bf16.gmra.mxu0 %v2277
  %v2395 = vpop.f32.mrf.mxu0
  %v2396 = vadd.f32 %v2228, %v2395
  %v2397 = vpop.f32.mrf.mxu0
  %v2398 = vadd.f32 %v2228, %v2397
  %2399 = vmatmul.bf16.gmra.mxu0 %v2280
  %v2400 = vpop.f32.mrf.mxu0
  %v2401 = vadd.f32 %v2228, %v2400
  %v2402 = vpop.f32.mrf.mxu0
  %v2403 = vadd.f32 %v2228, %v2402
  %2404 = vmatmul.bf16.gmra.mxu0 %v2283
  %v2405 = vpop.f32.mrf.mxu0
  %v2406 = vadd.f32 %v2228, %v2405
  %v2407 = vpop.f32.mrf.mxu0
  %v2408 = vadd.f32 %v2228, %v2407
  %2409 = vmatmul.bf16.gmra.mxu0 %v2286
  %v2410 = vpop.f32.mrf.mxu0
  %v2411 = vadd.f32 %v2228, %v2410
  %v2412 = vpop.f32.mrf.mxu0
  %v2413 = vadd.f32 %v2228, %v2412
  %2414 = vmatmul.bf16.gmra.mxu0 %v2289
  %v2415 = vpop.f32.mrf.mxu0
  %v2416 = vadd.f32 %v2228, %v2415
  %v2417 = vpop.f32.mrf.mxu0
  %v2418 = vadd.f32 %v2228, %v2417
  %2419 = vmatmul.bf16.gmra.mxu0 %v2292
  %v2420 = vpop.f32.mrf.mxu0
  %v2421 = vadd.f32 %v2228, %v2420
  %v2422 = vpop.f32.mrf.mxu0
  %v2423 = vadd.f32 %v2228, %v2422
  %2424 = vmatmul.bf16.gmra.mxu0 %v2295
  %v2425 = vpop.f32.mrf.mxu0
  %v2426 = vadd.f32 %v2228, %v2425
  %v2427 = vpop.f32.mrf.mxu0
  %v2428 = vadd.f32 %v2228, %v2427
  %2429 = vmatmul.bf16.gmra.mxu0 %v2298
  %v2430 = vpop.f32.mrf.mxu0
  %v2431 = vadd.f32 %v2228, %v2430
  %v2432 = vpop.f32.mrf.mxu0
  %v2433 = vadd.f32 %v2228, %v2432
  %2434 = vmatmul.bf16.gmra.mxu0 %v2301
  %v2435 = vpop.f32.mrf.mxu0
  %v2436 = vadd.f32 %v2228, %v2435
  %v2437 = vpop.f32.mrf.mxu0
  %v2438 = vadd.f32 %v2228, %v2437
  %2439 = vmatmul.bf16.gmra.mxu0 %v2304
  %v2440 = vpop.f32.mrf.mxu0
  %v2441 = vadd.f32 %v2228, %v2440
  %v2442 = vpop.f32.mrf.mxu0
  %v2443 = vadd.f32 %v2228, %v2442
  %2444 = vmatmul.bf16.gmra.mxu0 %v2307
  %v2445 = vpop.f32.mrf.mxu0
  %v2446 = vadd.f32 %v2228, %v2445
  %v2447 = vpop.f32.mrf.mxu0
  %v2448 = vadd.f32 %v2228, %v2447
  %2449 = vmatmul.bf16.gmra.mxu0 %v2310
  %v2450 = vpop.f32.mrf.mxu0
  %v2451 = vadd.f32 %v2228, %v2450
  %v2452 = vpop.f32.mrf.mxu0
  %v2453 = vadd.f32 %v2228, %v2452
  %2454 = vmatmul.bf16.gmra.mxu0 %v2313
  %v2455 = vpop.f32.mrf.mxu0
  %v2456 = vadd.f32 %v2228, %v2455
  %v2457 = vpop.f32.mrf.mxu0
  %v2458 = vadd.f32 %v2228, %v2457
  %2459 = vmatmul.bf16.gmra.mxu0 %v2316
  %v2460 = vpop.f32.mrf.mxu0
  %v2461 = vadd.f32 %v2228, %v2460
  %v2462 = vpop.f32.mrf.mxu0
  %v2463 = vadd.f32 %v2228, %v2462
  %2464 = vmatmul.bf16.gmra.mxu0 %v2319
  %v2465 = vpop.f32.mrf.mxu0
  %v2466 = vadd.f32 %v2228, %v2465
  %v2467 = vpop.f32.mrf.mxu0
  %v2468 = vadd.f32 %v2228, %v2467
  %2469 = vmatmul.bf16.gmra.mxu0 %v2322
  %v2470 = vpop.f32.mrf.mxu0
  %v2471 = vadd.f32 %v2228, %v2470
  %v2472 = vpop.f32.mrf.mxu0
  %v2473 = vadd.f32 %v2228, %v2472
  %2474 = vmatmul.bf16.gmra.mxu0 %v2325
  %v2475 = vpop.f32.mrf.mxu0
  %v2476 = vadd.f32 %v2228, %v2475
  %v2477 = vpop.f32.mrf.mxu0
  %v2478 = vadd.f32 %v2228, %v2477
  %2479 = vmatmul.bf16.gmra.mxu0 %v2328
  %v2480 = vpop.f32.mrf.mxu0
  %v2481 = vadd.f32 %v2228, %v2480
  %v2482 = vpop.f32.mrf.mxu0
  %v2483 = vadd.f32 %v2228, %v2482
  %2484 = vmatmul.bf16.gmra.mxu0 %v2331
  %v2485 = vpop.f32.mrf.mxu0
  %v2486 = vadd.f32 %v2228, %v2485
  %v2487 = vpop.f32.mrf.mxu0
  %v2488 = vadd.f32 %v2228, %v2487
  %2489 = vmatmul.bf16.gmra.mxu0 %v2334
  %v2490 = vpop.f32.mrf.mxu0
  %v2491 = vadd.f32 %v2228, %v2490
  %v2492 = vpop.f32.mrf.mxu0
  %v2493 = vadd.f32 %v2228, %v2492
  %2494 = vmatmul.bf16.gmra.mxu0 %v2337
  %v2495 = vpop.f32.mrf.mxu0
  %v2496 = vadd.f32 %v2228, %v2495
  %v2497 = vpop.f32.mrf.mxu0
  %v2498 = vadd.f32 %v2228, %v2497
  %2499 = vmatmul.bf16.gmra.mxu0 %v2340
  %v2500 = vpop.f32.mrf.mxu0
  %v2501 = vadd.f32 %v2228, %v2500
  %v2502 = vpop.f32.mrf.mxu0
  %v2503 = vadd.f32 %v2228, %v2502
  %2504 = vmatmul.bf16.gmra.mxu0 %v2343
  %v2505 = vpop.f32.mrf.mxu0
  %v2506 = vadd.f32 %v2228, %v2505
  %v2507 = vpop.f32.mrf.mxu0
  %v2508 = vadd.f32 %v2228, %v2507
  %2509 = vmatmul.bf16.gmra.mxu0 %v2346
  %v2510 = vpop.f32.mrf.mxu0
  %v2511 = vadd.f32 %v2228, %v2510
  %v2512 = vpop.f32.mrf.mxu0
  %v2513 = vadd.f32 %v2228, %v2512
  %2514 = vmatmul.bf16.gmra.mxu0 %v2349
  %v2515 = vpop.f32.mrf.mxu0
  %v2516 = vadd.f32 %v2228, %v2515
  %v2517 = vpop.f32.mrf.mxu0
  %v2518 = vadd.f32 %v2228, %v2517
  %2519 = vdwg.mxu0
  %v2520 = vsub.f32 %v2361, %v188
  %v2521 = vsub.f32 %v2363, %v189
  %v2522 = vsub.f32 %v2366, %v190
  %v2523 = vsub.f32 %v2368, %v191
  %v2524 = vsub.f32 %v2371, %v192
  %v2525 = vsub.f32 %v2373, %v193
  %v2526 = vsub.f32 %v2376, %v194
  %v2527 = vsub.f32 %v2378, %v195
  %v2528 = vsub.f32 %v2381, %v196
  %v2529 = vsub.f32 %v2383, %v197
  %v2530 = vsub.f32 %v2386, %v198
  %v2531 = vsub.f32 %v2388, %v199
  %v2532 = vsub.f32 %v2391, %v200
  %v2533 = vsub.f32 %v2393, %v201
  %v2534 = vsub.f32 %v2396, %v202
  %v2535 = vsub.f32 %v2398, %v203
  %v2536 = vsub.f32 %v2401, %v204
  %v2537 = vsub.f32 %v2403, %v205
  %v2538 = vsub.f32 %v2406, %v206
  %v2539 = vsub.f32 %v2408, %v207
  %v2540 = vsub.f32 %v2411, %v208
  %v2541 = vsub.f32 %v2413, %v209
  %v2542 = vsub.f32 %v2416, %v210
  %v2543 = vsub.f32 %v2418, %v211
  %v2544 = vsub.f32 %v2421, %v212
  %v2545 = vsub.f32 %v2423, %v213
  %v2546 = vsub.f32 %v2426, %v214
  %v2547 = vsub.f32 %v2428, %v215
  %v2548 = vsub.f32 %v2431, %v216
  %v2549 = vsub.f32 %v2433, %v217
  %v2550 = vsub.f32 %v2436, %v218
  %v2551 = vsub.f32 %v2438, %v219
  %v2552 = vsub.f32 %v2441, %v220
  %v2553 = vsub.f32 %v2443, %v221
  %v2554 = vsub.f32 %v2446, %v222
  %v2555 = vsub.f32 %v2448, %v223
  %v2556 = vsub.f32 %v2451, %v224
  %v2557 = vsub.f32 %v2453, %v225
  %v2558 = vsub.f32 %v2456, %v226
  %v2559 = vsub.f32 %v2458, %v227
  %v2560 = vsub.f32 %v2461, %v228
  %v2561 = vsub.f32 %v2463, %v229
  %v2562 = vsub.f32 %v2466, %v230
  %v2563 = vsub.f32 %v2468, %v231
  %v2564 = vsub.f32 %v2471, %v232
  %v2565 = vsub.f32 %v2473, %v233
  %v2566 = vsub.f32 %v2476, %v234
  %v2567 = vsub.f32 %v2478, %v235
  %v2568 = vsub.f32 %v2481, %v236
  %v2569 = vsub.f32 %v2483, %v237
  %v2570 = vsub.f32 %v2486, %v238
  %v2571 = vsub.f32 %v2488, %v239
  %v2572 = vsub.f32 %v2491, %v240
  %v2573 = vsub.f32 %v2493, %v241
  %v2574 = vsub.f32 %v2496, %v242
  %v2575 = vsub.f32 %v2498, %v243
  %v2576 = vsub.f32 %v2501, %v244
  %v2577 = vsub.f32 %v2503, %v245
  %v2578 = vsub.f32 %v2506, %v246
  %v2579 = vsub.f32 %v2508, %v247
  %v2580 = vsub.f32 %v2511, %v248
  %v2581 = vsub.f32 %v2513, %v249
  %v2582 = vsub.f32 %v2516, %v250
  %v2583 = vsub.f32 %v2518, %v251
  %v2584 = vmul.f32 %v2520, %v2520
  %v2585 = vmul.f32 %v2521, %v2521
  %v2586 = vmul.f32 %v2522, %v2522
  %v2587 = vmul.f32 %v2523, %v2523
  %v2588 = vmul.f32 %v2524, %v2524
  %v2589 = vmul.f32 %v2525, %v2525
  %v2590 = vmul.f32 %v2526, %v2526
  %v2591 = vmul.f32 %v2527, %v2527
  %v2592 = vmul.f32 %v2528, %v2528
  %v2593 = vmul.f32 %v2529, %v2529
  %v2594 = vmul.f32 %v2530, %v2530
  %v2595 = vmul.f32 %v2531, %v2531
  %v2596 = vmul.f32 %v2532, %v2532
  %v2597 = vmul.f32 %v2533, %v2533
  %v2598 = vmul.f32 %v2534, %v2534
  %v2599 = vmul.f32 %v2535, %v2535
  %v2600 = vmul.f32 %v2536, %v2536
  %v2601 = vmul.f32 %v2537, %v2537
  %v2602 = vmul.f32 %v2538, %v2538
  %v2603 = vmul.f32 %v2539, %v2539
  %v2604 = vmul.f32 %v2540, %v2540
  %v2605 = vmul.f32 %v2541, %v2541
  %v2606 = vmul.f32 %v2542, %v2542
  %v2607 = vmul.f32 %v2543, %v2543
  %v2608 = vmul.f32 %v2544, %v2544
  %v2609 = vmul.f32 %v2545, %v2545
  %v2610 = vmul.f32 %v2546, %v2546
  %v2611 = vmul.f32 %v2547, %v2547
  %v2612 = vmul.f32 %v2548, %v2548
  %v2613 = vmul.f32 %v2549, %v2549
  %v2614 = vmul.f32 %v2550, %v2550
  %v2615 = vmul.f32 %v2551, %v2551
  %v2616 = vmul.f32 %v2552, %v2552
  %v2617 = vmul.f32 %v2553, %v2553
  %v2618 = vmul.f32 %v2554, %v2554
  %v2619 = vmul.f32 %v2555, %v2555
  %v2620 = vmul.f32 %v2556, %v2556
  %v2621 = vmul.f32 %v2557, %v2557
  %v2622 = vmul.f32 %v2558, %v2558
  %v2623 = vmul.f32 %v2559, %v2559
  %v2624 = vmul.f32 %v2560, %v2560
  %v2625 = vmul.f32 %v2561, %v2561
  %v2626 = vmul.f32 %v2562, %v2562
  %v2627 = vmul.f32 %v2563, %v2563
  %v2628 = vmul.f32 %v2564, %v2564
  %v2629 = vmul.f32 %v2565, %v2565
  %v2630 = vmul.f32 %v2566, %v2566
  %v2631 = vmul.f32 %v2567, %v2567
  %v2632 = vmul.f32 %v2568, %v2568
  %v2633 = vmul.f32 %v2569, %v2569
  %v2634 = vmul.f32 %v2570, %v2570
  %v2635 = vmul.f32 %v2571, %v2571
  %v2636 = vmul.f32 %v2572, %v2572
  %v2637 = vmul.f32 %v2573, %v2573
  %v2638 = vmul.f32 %v2574, %v2574
  %v2639 = vmul.f32 %v2575, %v2575
  %v2640 = vmul.f32 %v2576, %v2576
  %v2641 = vmul.f32 %v2577, %v2577
  %v2642 = vmul.f32 %v2578, %v2578
  %v2643 = vmul.f32 %v2579, %v2579
  %v2644 = vmul.f32 %v2580, %v2580
  %v2645 = vmul.f32 %v2581, %v2581
  %v2646 = vmul.f32 %v2582, %v2582
  %v2647 = vmul.f32 %v2583, %v2583
  %v2648 = vld [vmem:[%s8] sm:$0xff]
  %vm2649 = vcmask 261120
  %v2650 = vsel %vm2649, %v2584, 0.0
  %v2651 = vsel %vm2649, %v2585, 0.0
  %v2652 = vadd.f32 %v2650, %v2651
  %v2653 = vsel %vm2649, %v2586, 0.0
  %v2654 = vadd.f32 %v2652, %v2653
  %v2655 = vsel %vm2649, %v2587, 0.0
  %v2656 = vadd.f32 %v2654, %v2655
  %v2657 = vsel %vm2649, %v2588, 0.0
  %v2658 = vadd.f32 %v2656, %v2657
  %v2659 = vsel %vm2649, %v2589, 0.0
  %v2660 = vadd.f32 %v2658, %v2659
  %v2661 = vsel %vm2649, %v2590, 0.0
  %v2662 = vadd.f32 %v2660, %v2661
  %v2663 = vsel %vm2649, %v2591, 0.0
  %v2664 = vadd.f32 %v2662, %v2663
  %v2665 = vsel %vm2649, %v2592, 0.0
  %v2666 = vadd.f32 %v2664, %v2665
  %v2667 = vsel %vm2649, %v2593, 0.0
  %v2668 = vadd.f32 %v2666, %v2667
  %v2669 = vsel %vm2649, %v2594, 0.0
  %v2670 = vadd.f32 %v2668, %v2669
  %v2671 = vsel %vm2649, %v2595, 0.0
  %v2672 = vadd.f32 %v2670, %v2671
  %v2673 = vsel %vm2649, %v2596, 0.0
  %v2674 = vadd.f32 %v2672, %v2673
  %v2675 = vsel %vm2649, %v2597, 0.0
  %v2676 = vadd.f32 %v2674, %v2675
  %v2677 = vsel %vm2649, %v2598, 0.0
  %v2678 = vadd.f32 %v2676, %v2677
  %v2679 = vsel %vm2649, %v2599, 0.0
  %v2680 = vadd.f32 %v2678, %v2679
  %v2681 = vsel %vm2649, %v2600, 0.0
  %v2682 = vadd.f32 %v2680, %v2681
  %v2683 = vsel %vm2649, %v2601, 0.0
  %v2684 = vadd.f32 %v2682, %v2683
  %v2685 = vsel %vm2649, %v2602, 0.0
  %v2686 = vadd.f32 %v2684, %v2685
  %v2687 = vsel %vm2649, %v2603, 0.0
  %v2688 = vadd.f32 %v2686, %v2687
  %v2689 = vsel %vm2649, %v2604, 0.0
  %v2690 = vadd.f32 %v2688, %v2689
  %v2691 = vsel %vm2649, %v2605, 0.0
  %v2692 = vadd.f32 %v2690, %v2691
  %v2693 = vsel %vm2649, %v2606, 0.0
  %v2694 = vadd.f32 %v2692, %v2693
  %v2695 = vsel %vm2649, %v2607, 0.0
  %v2696 = vadd.f32 %v2694, %v2695
  %v2697 = vsel %vm2649, %v2608, 0.0
  %v2698 = vadd.f32 %v2696, %v2697
  %v2699 = vsel %vm2649, %v2609, 0.0
  %v2700 = vadd.f32 %v2698, %v2699
  %v2701 = vsel %vm2649, %v2610, 0.0
  %v2702 = vadd.f32 %v2700, %v2701
  %v2703 = vsel %vm2649, %v2611, 0.0
  %v2704 = vadd.f32 %v2702, %v2703
  %v2705 = vsel %vm2649, %v2612, 0.0
  %v2706 = vadd.f32 %v2704, %v2705
  %v2707 = vsel %vm2649, %v2613, 0.0
  %v2708 = vadd.f32 %v2706, %v2707
  %v2709 = vsel %vm2649, %v2614, 0.0
  %v2710 = vadd.f32 %v2708, %v2709
  %v2711 = vsel %vm2649, %v2615, 0.0
  %v2712 = vadd.f32 %v2710, %v2711
  %v2713 = vsel %vm2649, %v2616, 0.0
  %v2714 = vadd.f32 %v2712, %v2713
  %v2715 = vsel %vm2649, %v2617, 0.0
  %v2716 = vadd.f32 %v2714, %v2715
  %v2717 = vsel %vm2649, %v2618, 0.0
  %v2718 = vadd.f32 %v2716, %v2717
  %v2719 = vsel %vm2649, %v2619, 0.0
  %v2720 = vadd.f32 %v2718, %v2719
  %v2721 = vsel %vm2649, %v2620, 0.0
  %v2722 = vadd.f32 %v2720, %v2721
  %v2723 = vsel %vm2649, %v2621, 0.0
  %v2724 = vadd.f32 %v2722, %v2723
  %v2725 = vsel %vm2649, %v2622, 0.0
  %v2726 = vadd.f32 %v2724, %v2725
  %v2727 = vsel %vm2649, %v2623, 0.0
  %v2728 = vadd.f32 %v2726, %v2727
  %v2729 = vsel %vm2649, %v2624, 0.0
  %v2730 = vadd.f32 %v2728, %v2729
  %v2731 = vsel %vm2649, %v2625, 0.0
  %v2732 = vadd.f32 %v2730, %v2731
  %v2733 = vsel %vm2649, %v2626, 0.0
  %v2734 = vadd.f32 %v2732, %v2733
  %v2735 = vsel %vm2649, %v2627, 0.0
  %v2736 = vadd.f32 %v2734, %v2735
  %v2737 = vsel %vm2649, %v2628, 0.0
  %v2738 = vadd.f32 %v2736, %v2737
  %v2739 = vsel %vm2649, %v2629, 0.0
  %v2740 = vadd.f32 %v2738, %v2739
  %v2741 = vsel %vm2649, %v2630, 0.0
  %v2742 = vadd.f32 %v2740, %v2741
  %v2743 = vsel %vm2649, %v2631, 0.0
  %v2744 = vadd.f32 %v2742, %v2743
  %v2745 = vsel %vm2649, %v2632, 0.0
  %v2746 = vadd.f32 %v2744, %v2745
  %v2747 = vsel %vm2649, %v2633, 0.0
  %v2748 = vadd.f32 %v2746, %v2747
  %v2749 = vsel %vm2649, %v2634, 0.0
  %v2750 = vadd.f32 %v2748, %v2749
  %v2751 = vsel %vm2649, %v2635, 0.0
  %v2752 = vadd.f32 %v2750, %v2751
  %v2753 = vsel %vm2649, %v2636, 0.0
  %v2754 = vadd.f32 %v2752, %v2753
  %v2755 = vsel %vm2649, %v2637, 0.0
  %v2756 = vadd.f32 %v2754, %v2755
  %v2757 = vsel %vm2649, %v2638, 0.0
  %v2758 = vadd.f32 %v2756, %v2757
  %v2759 = vsel %vm2649, %v2639, 0.0
  %v2760 = vadd.f32 %v2758, %v2759
  %v2761 = vsel %vm2649, %v2640, 0.0
  %v2762 = vadd.f32 %v2760, %v2761
  %v2763 = vsel %vm2649, %v2641, 0.0
  %v2764 = vadd.f32 %v2762, %v2763
  %v2765 = vsel %vm2649, %v2642, 0.0
  %v2766 = vadd.f32 %v2764, %v2765
  %v2767 = vsel %vm2649, %v2643, 0.0
  %v2768 = vadd.f32 %v2766, %v2767
  %v2769 = vsel %vm2649, %v2644, 0.0
  %v2770 = vadd.f32 %v2768, %v2769
  %v2771 = vsel %vm2649, %v2645, 0.0
  %v2772 = vadd.f32 %v2770, %v2771
  %v2773 = vsel %vm2649, %v2646, 0.0
  %v2774 = vadd.f32 %v2772, %v2773
  %v2775 = vsel %vm2649, %v2647, 0.0
  %v2776 = vadd.f32 %v2774, %v2775
  %v2777 = vadd.f32 %v2648, %v2776
  %2778 = vst.msk [vmem:[%s8] sm:$0xff] %vm2649, %v2777
  // Predicated region
  $region38: #{ddpm_loss_pallas.1} parent=0 // pred_check
    _
  $region39: #{ddpm_loss_pallas.1} parent=0 // pred_check_branch
    %2780 = sbr.rel (0) target = $region41
  $region40: #{ddpm_loss_pallas.1} parent=0 // pred_region
    _
  $region41: #{ddpm_loss_pallas.1} parent=0 // pred_fallthru
    _
  // Predicated region
  $region42: #{ddpm_loss_pallas.1} parent=0 // pred_check
    _
  $region43: #{ddpm_loss_pallas.1} parent=0 // pred_check_branch
    %2782 = sbr.rel (0) target = $region45
  $region44: #{ddpm_loss_pallas.1} parent=0 // pred_region
    _
  $region45: #{ddpm_loss_pallas.1} parent=0 // pred_fallthru
    _

</llo_original>
